<compile_context>
chip_gen: v5e
topology: v5e:2x2
jax: 0.10.0
libtpu: 0.0.40
codegen_flags: <defaults>
</compile_context>

<pallas_src>
import jax
import jax.numpy as jnp
from jax.experimental import pallas as pl
from jax.experimental.pallas import tpu as pltpu


def dps_partial_kernel(scal_ref, x_ref, a_ref, y_ref, atr_ref, ss_ref):
    """Streams one (tile_m, D) bf16 tile of A per grid step.

    grid = (num_splits, tiles_per_split); axis 0 is megacore-parallel, axis 1 is the
    M reduction.  Outputs are per-split partials that stay VMEM-resident across the
    reduction axis (accumulator pattern):

      scal_ref : SMEM (2,) f32  -> [c = 1/(1+sigma^2), coef = sigma^2*zeta*c] (prefetched)
      x_ref    : VMEM (1, D) f32       noisy input x_t (resident across the grid)
      a_ref    : VMEM (tile_m, D) bf16 streamed A tile
      y_ref    : VMEM (1, tile_m) f32  matching measurement slice
      atr_ref  : VMEM (1, D) f32       partial A^T r for this split
      ss_ref   : VMEM (1, 128) f32     partial sum(r^2) (scalar broadcast across lanes)
    """
    m = pl.program_id(1)

    @pl.when(m == 0)
    def _():
        atr_ref[...] = jnp.zeros_like(atr_ref)
        ss_ref[...] = jnp.zeros_like(ss_ref)

    c = scal_ref[0]                          # synthetic linear uncond_pred scale 1/(1+sigma^2)
    x_bf = x_ref[...].astype(jnp.bfloat16)   # bf16 only at the MXU operand
    a = a_ref[...]                           # (tile_m, D) bf16

    # operator.forward on the *unscaled* x: A_t @ x, contracting on A's last dim
    # (the MXU-native "q @ k.T" form -> no in-kernel transpose/relayout of the A tile).
    ax = jax.lax.dot_general(x_bf, a, (((1,), (1,)), ((), ())),
                             preferred_element_type=jnp.float32)      # (1, tile_m) f32

    # Deferred uncond_pred scale: r = y - A(c*x) = y - c*(A x)  (f32 subtraction).
    r = y_ref[...] - c * ax                                           # (1, tile_m) f32
    ss_ref[...] += jnp.sum(r * r)

    # grad(||y - A(c x)||, x) direction: accumulate A_t^T r (the c/zeta/1/||r|| scales
    # are folded into the combine epilogue).
    at_r = jax.lax.dot_general(r.astype(jnp.bfloat16), a, (((1,), (0,)), ((), ())),
                               preferred_element_type=jnp.float32)    # (1, D) f32
    atr_ref[...] += at_r


def dps_combine_kernel(scal_ref, x_ref, atr_ref, ss_ref, out_ref):
    """Tiny epilogue: combine per-split partials, normalize, apply guidance, clip.

    atr_ref : VMEM (num_splits, 1, D)   partial A^T r per split
    ss_ref  : VMEM (num_splits, 1, 128) partial ||r||^2 per split (lane-broadcast)
    out_ref : VMEM (1, D)               hat_x0 (clipped)
    """
    c = scal_ref[0]
    coef = scal_ref[1]                                   # sigma^2 * zeta * c
    atr = jnp.sum(atr_ref[...], axis=0)                  # (1, D) total A^T r
    # every lane of a split's ss row holds the same partial -> max over lanes is exact
    ss = jnp.sum(jnp.max(ss_ref[...], axis=-1))          # total ||r||^2
    inv_norm = jax.lax.rsqrt(ss + 1e-20)                 # EUP rsqrt; eps guards r == 0
    # hat_x0 = x0_mean + sigma^2 * likelihood_score, then .clip(-1, 1)
    out_ref[...] = jnp.clip(c * x_ref[...] + (coef * inv_norm) * atr, -1.0, 1.0)


def _choose_tile_m(m_per_split, d, max_tile_bytes=2 << 20):
    """Largest 128-aligned divisor of m_per_split whose bf16 (tile, d) tile fits the
    byte budget, preferring multiples of 256 (v6e/v7x MXU width). Whole chunk fallback."""
    aligned = [t for t in range(128, m_per_split + 1, 128) if m_per_split % t == 0]
    if not aligned:
        return m_per_split                       # tiny / unaligned M: one whole-chunk block
    fitting = [t for t in aligned if t * d * 2 <= max_tile_bytes] or aligned[:1]
    pref = [t for t in fitting if t % 256 == 0]
    return max(pref) if pref else max(fitting)


def condition_denoiser_dps(x, sigma, A_bf16, y, zeta):
    """ConditionDenoiser.forward with guidance='dps' (concrete instantiation).

    A_bf16 should be cast to bfloat16 once, outside the per-step call.
    """
    N, C, H, W = x.shape
    assert N == 1, "ConditionDenoiser.forward asserts x.shape[0] == 1"
    D = C * H * W
    M = A_bf16.shape[0]
    assert A_bf16.shape == (M, D) and A_bf16.dtype == jnp.bfloat16

    x_flat = x.reshape(1, D).astype(jnp.float32)
    y_row = y.reshape(1, M).astype(jnp.float32)

    sigma2 = jnp.float32(sigma) ** 2
    c = 1.0 / (1.0 + sigma2)
    coef = sigma2 * jnp.float32(zeta) * c
    scal = jnp.stack([c, coef]).astype(jnp.float32)

    # --- tiling: one HBM pass over A, streamed in M-tiles, split across TensorCores ---
    num_splits = 2 if M % 256 == 0 else 1        # use both v7x TCs; harmless on 1-TC chips
    m_per_split = M // num_splits
    tile_m = _choose_tile_m(m_per_split, D)
    assert m_per_split % tile_m == 0
    tiles_per_split = m_per_split // tile_m

    tile_bytes = tile_m * D * 2
    # double-buffered A tile + y tiles + resident x + partial outputs + headroom
    need = (2 * tile_bytes + 4 * tile_m * 4 + 4 * D * 4
            + 2 * num_splits * (D + 128) * 4 + (4 << 20))
    try:
        phys = pltpu.get_tpu_info().vmem_capacity_bytes   # 128 MiB v5e/v6e, 64 MiB v7x
    except Exception:
        phys = 64 << 20                                   # assume the smallest budget
    cap = max(phys - (16 << 20), 32 << 20)                # generation-aware ceiling
    vmem_limit = int(min(max(need, 32 << 20), cap))

    cost = pl.CostEstimate(
        flops=4 * M * D + 4 * M,            # two matvecs (2 flops/MAC) + residual epilogue
        transcendentals=0,
        bytes_accessed=M * D * 2 + (D + M) * 4 + num_splits * (D + 128) * 4,
    )

    partial_atr, partial_ss = pl.pallas_call(
        dps_partial_kernel,
        out_shape=(
            jax.ShapeDtypeStruct((num_splits, 1, D), jnp.float32),
            jax.ShapeDtypeStruct((num_splits, 1, 128), jnp.float32),
        ),
        grid_spec=pltpu.PrefetchScalarGridSpec(
            num_scalar_prefetch=1,
            grid=(num_splits, tiles_per_split),
            in_specs=[
                pl.BlockSpec((1, D), lambda s, m, _: (0, 0)),              # x: resident
                pl.BlockSpec((tile_m, D),                                  # A: streamed once
                             lambda s, m, _: (s * tiles_per_split + m, 0)),
                pl.BlockSpec((1, tile_m),                                  # y: matching slice
                             lambda s, m, _: (0, s * tiles_per_split + m)),
            ],
            out_specs=[
                pl.BlockSpec((None, 1, D), lambda s, m, _: (s, 0, 0)),     # partial A^T r
                pl.BlockSpec((None, 1, 128), lambda s, m, _: (s, 0, 0)),   # partial ||r||^2
            ],
        ),
        compiler_params=pltpu.CompilerParams(
            dimension_semantics=("parallel", "arbitrary"),   # split parallel, M reduction
            vmem_limit_bytes=vmem_limit,
        ),
        cost_estimate=cost,
    )(scal, x_flat, A_bf16, y_row)

    out_flat = pl.pallas_call(
        dps_combine_kernel,
        out_shape=jax.ShapeDtypeStruct((1, D), jnp.float32),
        in_specs=[
            pl.BlockSpec(memory_space=pltpu.MemorySpace.SMEM),   # scalars
            pl.BlockSpec(memory_space=pltpu.MemorySpace.VMEM),   # x
            pl.BlockSpec(memory_space=pltpu.MemorySpace.VMEM),   # partial A^T r
            pl.BlockSpec(memory_space=pltpu.MemorySpace.VMEM),   # partial ||r||^2
        ],
        out_specs=pl.BlockSpec(memory_space=pltpu.MemorySpace.VMEM),
        compiler_params=pltpu.CompilerParams(vmem_limit_bytes=32 << 20),
        cost_estimate=pl.CostEstimate(
            flops=6 * D, transcendentals=1,
            bytes_accessed=(2 * D + num_splits * (D + 128)) * 4),
    )(scal, x_flat, partial_atr, partial_ss)

    return out_flat.reshape(N, C, H, W)


def _reference(x, sigma, A_bf16, y, zeta):
    """Pure-JAX reference mirroring the kernel numerics (bf16 MXU operands, f32 acc)."""
    N, C, H, W = x.shape
    D = C * H * W
    sigma2 = jnp.float32(sigma) ** 2
    c = 1.0 / (1.0 + sigma2)
    coef = sigma2 * jnp.float32(zeta) * c
    x_flat = x.reshape(1, D).astype(jnp.float32)
    ax = jax.lax.dot_general(
        x_flat.astype(jnp.bfloat16), A_bf16, (((1,), (1,)), ((), ())),
        preferred_element_type=jnp.float32)
    r = y.reshape(1, -1).astype(jnp.float32) - c * ax
    inv_norm = jax.lax.rsqrt(jnp.sum(r * r) + 1e-20)
    at_r = jax.lax.dot_general(
        r.astype(jnp.bfloat16), A_bf16, (((1,), (0,)), ((), ())),
        preferred_element_type=jnp.float32)
    out = jnp.clip(c * x_flat + (coef * inv_norm) * at_r, -1.0, 1.0)
    return out.reshape(N, C, H, W)


# TODO(synk): loglikelihood / LazyLikelihoodCovariance (gpytorch MultivariateNormal with a
# lazy linear operator) and the external __MAT_SOLVER__/__PROXIMAL_SOLVER__ registries
# (pgdm/diffpir/type-I/II/autoI branches) have no clean Pallas equivalent; only the DPS
# guidance branch of forward() is implemented here with a concrete linear operator and a
# synthetic linear-MMSE uncond_pred.
# TODO(synk): a further ~2x on the dominant A HBM traffic is available by storing A as
# int8 + per-row scales on v5e/v6e (fp8 e4m3 on v7x, which has no integer MXU path);
# kept bf16 here to keep the guidance numerics simple.


if __name__ == "__main__":
    key = jax.random.PRNGKey(0)
    k_x, k_a, k_true, k_noise = jax.random.split(key, 4)

    # shapes consistent with the forward: batch=1 (asserted by the module), C=4, H=W=16
    N, C, H, W = 1, 4, 16, 16
    D = C * H * W          # 1024
    M = 512                # measurement dim (multiple of 256 -> 2-way TC split engages)

    x = jax.random.normal(k_x, (N, C, H, W), dtype=jnp.float32)
    A = jax.random.normal(k_a, (M, D), dtype=jnp.float32) / jnp.sqrt(D)
    A_bf = A.astype(jnp.bfloat16)   # cast once; reused across the diffusion trajectory
    x_true = jax.random.normal(k_true, (1, D), dtype=jnp.float32)
    sigma_s = 0.05
    y = x_true @ A.T + sigma_s * jax.random.normal(k_noise, (1, M), dtype=jnp.float32)

    sigma = 0.5
    zeta = 1.0

    out = condition_denoiser_dps(x, sigma, A_bf, y, zeta)
    out = jax.block_until_ready(out)

    ref = _reference(x, sigma, A_bf, y, zeta)
    assert out.shape == (N, C, H, W)
    assert jnp.allclose(out, ref, atol=1e-2, rtol=1e-2), float(jnp.max(jnp.abs(out - ref)))

    print("KERNEL_OK")
</pallas_src>

<mosaic_0001>
module attributes {stable_mosaic.version = 11 : i64} {
  func.func @dps_partial_kernel(%arg0: i32, %arg1: i32, %arg2: memref<2xf32, #tpu.memory_space<smem>>, %arg3: memref<1x1024xf32, #tpu.memory_space<vmem>>, %arg4: memref<256x1024xbf16, #tpu.memory_space<vmem>>, %arg5: memref<1x256xf32, #tpu.memory_space<vmem>>, %arg6: memref<1x1x1024xf32, #tpu.memory_space<vmem>>, %arg7: memref<1x1x128xf32, #tpu.memory_space<vmem>>) attributes {dimension_semantics = [#tpu.dimension_semantics<parallel>, #tpu.dimension_semantics<arbitrary>], iteration_bounds = array<i64: 2, 1>, scalar_prefetch = 1 : i64, scratch_operands = 0 : i64, tpu.core_type = #tpu.core_type<tc>, window_params = [{pipeline_mode = #tpu.pipeline_mode<synchronous>, transform_indices = @transform_0, window_bounds = array<i64: 1, 1024>}, {transform_indices = @transform_1, window_bounds = array<i64: 256, 1024>}, {transform_indices = @transform_2, window_bounds = array<i64: 1, 256>}, {transform_indices = @transform_3, window_bounds = array<i64: 1, 1, 1024>}, {transform_indices = @transform_4, window_bounds = array<i64: 1, 1, 128>}]} {
    %c0_i32 = arith.constant 0 : i32
    %0 = arith.cmpi eq, %arg1, %c0_i32 : i32
    %1 = arith.extui %0 : i1 to i32
    %c0_i32_0 = arith.constant 0 : i32
    %2 = arith.cmpi ne, %1, %c0_i32_0 : i32
    scf.if %2 {
      %cst_21 = arith.constant 0.000000e+00 : f32
      %32 = vector.broadcast %cst_21 : f32 to vector<1x1024xf32>
      %c0_22 = arith.constant 0 : index
      %c0_23 = arith.constant 0 : index
      %c0_24 = arith.constant 0 : index
      %33 = vector.load %arg6[%c0_22, %c0_23, %c0_24] : memref<1x1x1024xf32, #tpu.memory_space<vmem>>, vector<1x1x1024xf32>
      %34 = vector.shape_cast %33 : vector<1x1x1024xf32> to vector<1x1024xf32>
      %35 = vector.shape_cast %32 : vector<1x1024xf32> to vector<1x1x1024xf32>
      tpu.vector_store %arg6[%c0_22, %c0_23, %c0_24], %35 {strides = array<i32>} : memref<1x1x1024xf32, #tpu.memory_space<vmem>>, vector<1x1x1024xf32>,
      %cst_25 = arith.constant 0.000000e+00 : f32
      %36 = vector.broadcast %cst_25 : f32 to vector<1x128xf32>
      %c0_26 = arith.constant 0 : index
      %c0_27 = arith.constant 0 : index
      %c0_28 = arith.constant 0 : index
      %37 = vector.load %arg7[%c0_26, %c0_27, %c0_28] : memref<1x1x128xf32, #tpu.memory_space<vmem>>, vector<1x1x128xf32>
      %38 = vector.shape_cast %37 : vector<1x1x128xf32> to vector<1x128xf32>
      %39 = vector.shape_cast %36 : vector<1x128xf32> to vector<1x1x128xf32>
      tpu.vector_store %arg7[%c0_26, %c0_27, %c0_28], %39 {strides = array<i32>} : memref<1x1x128xf32, #tpu.memory_space<vmem>>, vector<1x1x128xf32>,
    } else {
    }
    %c0 = arith.constant 0 : index
    %3 = memref.load %arg2[%c0] : memref<2xf32, #tpu.memory_space<smem>>
    %c0_1 = arith.constant 0 : index
    %c0_2 = arith.constant 0 : index
    %4 = vector.load %arg3[%c0_1, %c0_2] : memref<1x1024xf32, #tpu.memory_space<vmem>>, vector<1x1024xf32>
    %5 = arith.truncf %4 : vector<1x1024xf32> to vector<1x1024xbf16>
    %c0_3 = arith.constant 0 : index
    %c0_4 = arith.constant 0 : index
    %6 = vector.load %arg4[%c0_3, %c0_4] : memref<256x1024xbf16, #tpu.memory_space<vmem>>, vector<256x1024xbf16>
    %cst = arith.constant dense<0.000000e+00> : vector<1x256xf32>
    %7 = tpu.matmul %5, %6, %cst {dimension_numbers = #tpu.dot_dimension_numbers<[1], [1], [0], [0], [0, 0, 1, 0], [], []>} : vector<1x1024xbf16>, vector<256x1024xbf16>, vector<1x256xf32> -> vector<1x256xf32>
    %c0_5 = arith.constant 0 : index
    %c0_6 = arith.constant 0 : index
    %8 = vector.load %arg5[%c0_5, %c0_6] : memref<1x256xf32, #tpu.memory_space<vmem>>, vector<1x256xf32>
    %9 = vector.broadcast %3 : f32 to vector<1x256xf32>
    %10 = arith.mulf %9, %7 : vector<1x256xf32>
    %11 = arith.subf %8, %10 : vector<1x256xf32>
    %c0_7 = arith.constant 0 : index
    %c0_8 = arith.constant 0 : index
    %c0_9 = arith.constant 0 : index
    %12 = vector.load %arg7[%c0_7, %c0_8, %c0_9] : memref<1x1x128xf32, #tpu.memory_space<vmem>>, vector<1x1x128xf32>
    %13 = vector.shape_cast %12 : vector<1x1x128xf32> to vector<1x128xf32>
    %14 = arith.mulf %11, %11 : vector<1x256xf32>
    %15 = vector.shape_cast %14 : vector<1x256xf32> to vector<1x1x256xf32>
    %cst_10 = arith.constant dense<0.000000e+00> : vector<1xf32>
    %16 = vector.multi_reduction <add>, %15, %cst_10 [1, 2] : vector<1x1x256xf32> to vector<1xf32>
    %17 = vector.shape_cast %16 : vector<1xf32> to vector<1x1x1xf32>
    %18 = vector.extract %17[0, 0, 0] : f32 from vector<1x1x1xf32>
    %19 = vector.broadcast %18 : f32 to vector<1x128xf32>
    %20 = arith.addf %13, %19 : vector<1x128xf32>
    %c0_11 = arith.constant 0 : index
    %c0_12 = arith.constant 0 : index
    %c0_13 = arith.constant 0 : index
    %21 = vector.load %arg7[%c0_11, %c0_12, %c0_13] : memref<1x1x128xf32, #tpu.memory_space<vmem>>, vector<1x1x128xf32>
    %22 = vector.shape_cast %21 : vector<1x1x128xf32> to vector<1x128xf32>
    %23 = vector.shape_cast %20 : vector<1x128xf32> to vector<1x1x128xf32>
    tpu.vector_store %arg7[%c0_11, %c0_12, %c0_13], %23 {strides = array<i32>} : memref<1x1x128xf32, #tpu.memory_space<vmem>>, vector<1x1x128xf32>,
    %24 = arith.truncf %11 : vector<1x256xf32> to vector<1x256xbf16>
    %cst_14 = arith.constant dense<0.000000e+00> : vector<1x1024xf32>
    %25 = tpu.matmul %24, %6, %cst_14 {dimension_numbers = #tpu.dot_dimension_numbers<[1], [0], [0], [1], [0, 0, 1, 1], [], []>} : vector<1x256xbf16>, vector<256x1024xbf16>, vector<1x1024xf32> -> vector<1x1024xf32>
    %c0_15 = arith.constant 0 : index
    %c0_16 = arith.constant 0 : index
    %c0_17 = arith.constant 0 : index
    %26 = vector.load %arg6[%c0_15, %c0_16, %c0_17] : memref<1x1x1024xf32, #tpu.memory_space<vmem>>, vector<1x1x1024xf32>
    %27 = vector.shape_cast %26 : vector<1x1x1024xf32> to vector<1x1024xf32>
    %28 = arith.addf %27, %25 : vector<1x1024xf32>
    %c0_18 = arith.constant 0 : index
    %c0_19 = arith.constant 0 : index
    %c0_20 = arith.constant 0 : index
    %29 = vector.load %arg6[%c0_18, %c0_19, %c0_20] : memref<1x1x1024xf32, #tpu.memory_space<vmem>>, vector<1x1x1024xf32>
    %30 = vector.shape_cast %29 : vector<1x1x1024xf32> to vector<1x1024xf32>
    %31 = vector.shape_cast %28 : vector<1x1024xf32> to vector<1x1x1024xf32>
    tpu.vector_store %arg6[%c0_18, %c0_19, %c0_20], %31 {strides = array<i32>} : memref<1x1x1024xf32, #tpu.memory_space<vmem>>, vector<1x1x1024xf32>,
    return
  }
  func.func @transform_0(%arg0: i32, %arg1: i32, %arg2: memref<2xf32, #tpu.memory_space<smem>>) -> (i32, i32) {
    %c0_i32 = arith.constant 0 : i32
    %c0_i32_0 = arith.constant 0 : i32
    %c0_i32_1 = arith.constant 0 : i32
    return %c0_i32, %c0_i32_0 : i32, i32
  }
  func.func @transform_1(%arg0: i32, %arg1: i32, %arg2: memref<2xf32, #tpu.memory_space<smem>>) -> (i32, i32) {
    %c1_i32 = arith.constant 1 : i32
    %0 = arith.muli %arg0, %c1_i32 : i32
    %1 = arith.addi %0, %arg1 : i32
    %c0_i32 = arith.constant 0 : i32
    %c0_i32_0 = arith.constant 0 : i32
    return %1, %c0_i32 : i32, i32
  }
  func.func @transform_2(%arg0: i32, %arg1: i32, %arg2: memref<2xf32, #tpu.memory_space<smem>>) -> (i32, i32) {
    %c1_i32 = arith.constant 1 : i32
    %0 = arith.muli %arg0, %c1_i32 : i32
    %1 = arith.addi %0, %arg1 : i32
    %c0_i32 = arith.constant 0 : i32
    %c0_i32_0 = arith.constant 0 : i32
    return %c0_i32, %1 : i32, i32
  }
  func.func @transform_3(%arg0: i32, %arg1: i32, %arg2: memref<2xf32, #tpu.memory_space<smem>>) -> (i32, i32, i32) {
    %c0_i32 = arith.constant 0 : i32
    %c0_i32_0 = arith.constant 0 : i32
    %c0_i32_1 = arith.constant 0 : i32
    return %arg0, %c0_i32, %c0_i32_0 : i32, i32, i32
  }
  func.func @transform_4(%arg0: i32, %arg1: i32, %arg2: memref<2xf32, #tpu.memory_space<smem>>) -> (i32, i32, i32) {
    %c0_i32 = arith.constant 0 : i32
    %c0_i32_0 = arith.constant 0 : i32
    %c0_i32_1 = arith.constant 0 : i32
    return %arg0, %c0_i32, %c0_i32_0 : i32, i32, i32
  }
}

</mosaic_0001>

<llo_original>
// kernel: tpu_custom_call.1
$region0: #{tpu_custom_call.1}
  #allocation0 [shape = 'u32[]', space=smem, size = 0x4, offset = 0x4, fixed_abs, tag = 'smem constant byte address 0x4 - core index']
  #allocation1 [shape = 'u32[72,128]{1,0:T(1,128)}', space=vmem, size = 0x9000, scoped, tag = 'internal scratch']
  #allocation2 [shape = 's32[1]{0}', space=sflag, size = 0x4, scoped, tag = 'scoped memory for tpu_custom_call.1']
  #allocation3 [shape = 'u8[512]{0}', space=smem, size = 0x200, scoped, tag = 'prefetched SMEM operand 0']
  %s0 = inlined_call_operand.hbm [shape: f32[2], index: 0, kind: input, shape index: {}]
  %s1 = inlined_call_operand.hbm [shape: f32[1,1024], index: 1, kind: input, shape index: {}]
  %s2 = inlined_call_operand.hbm [shape: bf16[512,1024], index: 2, kind: input, shape index: {}]
  %s3 = inlined_call_operand.hbm [shape: f32[1,512], index: 3, kind: input, shape index: {}]
  %s4 = inlined_call_operand.hbm [shape: f32[2,1,1024], index: 4, kind: output, shape index: {0}]
  %s5 = inlined_call_operand.hbm [shape: f32[2,1,128], index: 5, kind: output, shape index: {1}]
  %6 = xla_tuple %s4, %s5
  %s7 = sld [smem:[#allocation0]]
  $region69: #{tpu_custom_call.1} parent=0
    _
  %s9 = ssub.s32 1, %s7
  %s10 = scalar_select 0, %s9, %s7
  %s12 = sshll.u32 %s0, 4
  %s13 = int_to_ptr.hbm [resolvable:$true] %s12
  %15 = dma.hbm_to_smem %s13, 16, [#allocation3], [#allocation2]
  %17 = dma.done [#allocation2], 16
  %18 = sfence
  $region1: #{tpu_custom_call.1} parent=0
    #allocation4 [shape = 'u8[4096]{0}', space=vmem, size = 0x1000, scoped, tag = 'input window, operand 1, single buffered']
    #allocation5 [shape = 's32[2]{0}', space=sflag, size = 0x8, scoped, tag = 'scoped memory for tpu_custom_call.1']
    #allocation6 [shape = 's32[2]{0}', space=sflag, size = 0x8, scoped, tag = 'scoped memory for tpu_custom_call.1']
    #allocation7 [shape = 'u8[1048576]{0}', space=vmem, size = 0x100000, scoped, tag = 'input window, operand 2']
    #allocation8 [shape = 's32[2]{0}', space=sflag, size = 0x8, scoped, tag = 'scoped memory for tpu_custom_call.1']
    #allocation9 [shape = 'u8[2048]{0}', space=vmem, size = 0x800, scoped, tag = 'input window, operand 3']
    #allocation10 [shape = 'u8[8192]{0}', space=vmem, size = 0x2000, scoped, tag = 'output window, operand 0']
    #allocation11 [shape = 'u8[1024]{0}', space=vmem, size = 0x400, scoped, tag = 'output window, operand 1']
    #allocation12 [shape = 's32[2]{0}', space=sflag, size = 0x8, scoped, tag = 'scoped memory for tpu_custom_call.1']
    %19 = vsyncpa [#allocation5], 0
    %20 = vsyncpa [#allocation8], 0
    %s21 = scalar_lea.sflag [#allocation8], 1
    %22 = vsyncpa %s21, 0
    %23 = vsyncpa [#allocation6], 0
    %s24 = scalar_lea.sflag [#allocation6], 1
    %25 = vsyncpa %s24, 0
    %26 = vsyncpa [#allocation12], 0
    %s27 = scalar_lea.sflag [#allocation12], 1
    %28 = vsyncpa %s27, 0
    loop: start=0, step=1, limit=4
    $region2: #{tpu_custom_call.1} parent=1 // loop_pre_header
      _
    $region3: #{tpu_custom_call.1} parent=1 // loop_header
      %s30 = sphi 0, %s34
      %p31 = scmp.ge.s32.totalorder %s30, 4
      %s37 = sphi 0, %s49
      %s38 = sphi 0, %s45
      %s39 = sphi 0, %s37
      %s40 = sphi 0, %s38
      %s41 = sphi 0, %s39
      %s42 = sphi 0, %s40
      %s50 = sphi 0, %s50
      %s52 = sphi 0, %s50
      %s53 = sphi 0, %s52
      %s67 = sphi 0, %s53
      %s75 = sphi 0, %s77
      %s78 = sphi 0, %s75
      %s79 = sphi 0, %s78
      %s95 = sphi 0, %s79
      %s103 = sphi 0, %s105
      %s106 = sphi 0, %s103
      %s107 = sphi 0, %s106
      %s123 = sphi 0, %s107
      %s129 = sphi 0, %s131
      %s132 = sphi 0, %s129
      %s133 = sphi 0, %s132
      %s149 = sphi 0, %s133
      %s155 = sphi 0, %s157
      %s158 = sphi 0, %s155
      %s159 = sphi 0, %s158
      %s175 = sphi 0, %s159
    $region4: #{tpu_custom_call.1} parent=1 // loop_header_branch
      %33 = sbr.rel (%p31) target = $region8
    $region5: #{tpu_custom_call.1} parent=1 // loop_body
      %s35 = ssub.s32 %s30, 1
      %s36 = ssub.s32 %s30, 2
      %s43 = sadd.s32 1, %s38
      %p44 = scmp.ge.s32.totalorder %s43, 1
      %s45 = scalar_select %p44, 0, %s43
      %s46 = sadd.s32 1, %s37
      %s47 = scalar_select %p44, %s46, %s37
      %p48 = scmp.ge.s32.totalorder %s47, 2
      %s49 = scalar_select %p48, 0, %s47
      %s51 = sadd.s32 %s50, 1
      %p54 = scmp.eq.s32.totalorder %s30, 1
      %p55 = scmp.ne.s32.totalorder %s50, %s52
      %p56 = scmp.eq.s32.totalorder %s30, 0
      %p57 = por %p55, %p56
      %p58 = scmp.ne.s32.totalorder %s50, %s52
      %p59 = scmp.eq.s32.totalorder %s35, 1
      %p60 = por %p58, %p59
      %p61 = scmp.ne.s32.totalorder %s52, %s53
      %p62 = scmp.eq.s32.totalorder %s35, 0
      %p63 = por %p61, %p62
      %p64 = scmp.ne.s32.totalorder %s52, %s53
      %p65 = scmp.eq.s32.totalorder %s36, 1
      %p66 = por %p64, %p65
      %p68 = scmp.ne.s32.totalorder %s53, %s67
      %p69 = scmp.eq.s32.totalorder %s36, 0
      %p70 = por %p68, %p69
      %s71 = sadd.s32 %s37, %s38
      %s72 = sadd.s32 %s49, %s45
      %s73 = ssub.s32 %s71, %s72
      %p74 = scmp.eq.s32.totalorder %s73, 0
      %s76 = sadd.s32 %s75, 1
      %s77 = scalar_select %p74, %s75, %s76
      %p80 = pneg %p74
      %p81 = scmp.eq.s32.totalorder %s30, 1
      %p82 = por %p80, %p81
      %p83 = scmp.ne.s32.totalorder %s75, %s78
      %p84 = scmp.eq.s32.totalorder %s30, 0
      %p85 = por %p83, %p84
      %p86 = scmp.ne.s32.totalorder %s75, %s78
      %p87 = scmp.eq.s32.totalorder %s35, 1
      %p88 = por %p86, %p87
      %p89 = scmp.ne.s32.totalorder %s78, %s79
      %p90 = scmp.eq.s32.totalorder %s35, 0
      %p91 = por %p89, %p90
      %p92 = scmp.ne.s32.totalorder %s78, %s79
      %p93 = scmp.eq.s32.totalorder %s36, 1
      %p94 = por %p92, %p93
      %p96 = scmp.ne.s32.totalorder %s79, %s95
      %p97 = scmp.eq.s32.totalorder %s36, 0
      %p98 = por %p96, %p97
      %s99 = sadd.s32 %s37, %s38
      %s100 = sadd.s32 %s49, %s45
      %s101 = ssub.s32 %s99, %s100
      %p102 = scmp.eq.s32.totalorder %s101, 0
      %s104 = sadd.s32 %s103, 1
      %s105 = scalar_select %p102, %s103, %s104
      %p108 = pneg %p102
      %p109 = scmp.eq.s32.totalorder %s30, 1
      %p110 = por %p108, %p109
      %p111 = scmp.ne.s32.totalorder %s103, %s106
      %p112 = scmp.eq.s32.totalorder %s30, 0
      %p113 = por %p111, %p112
      %p114 = scmp.ne.s32.totalorder %s103, %s106
      %p115 = scmp.eq.s32.totalorder %s35, 1
      %p116 = por %p114, %p115
      %p117 = scmp.ne.s32.totalorder %s106, %s107
      %p118 = scmp.eq.s32.totalorder %s35, 0
      %p119 = por %p117, %p118
      %p120 = scmp.ne.s32.totalorder %s106, %s107
      %p121 = scmp.eq.s32.totalorder %s36, 1
      %p122 = por %p120, %p121
      %p124 = scmp.ne.s32.totalorder %s107, %s123
      %p125 = scmp.eq.s32.totalorder %s36, 0
      %p126 = por %p124, %p125
      %s127 = ssub.s32 %s37, %s49
      %p128 = scmp.eq.s32.totalorder %s127, 0
      %s130 = sadd.s32 %s129, 1
      %s131 = scalar_select %p128, %s129, %s130
      %p134 = pneg %p128
      %p135 = scmp.eq.s32.totalorder %s30, 1
      %p136 = por %p134, %p135
      %p137 = scmp.ne.s32.totalorder %s129, %s132
      %p138 = scmp.eq.s32.totalorder %s30, 0
      %p139 = por %p137, %p138
      %p140 = scmp.ne.s32.totalorder %s129, %s132
      %p141 = scmp.eq.s32.totalorder %s35, 1
      %p142 = por %p140, %p141
      %p143 = scmp.ne.s32.totalorder %s132, %s133
      %p144 = scmp.eq.s32.totalorder %s35, 0
      %p145 = por %p143, %p144
      %p146 = scmp.ne.s32.totalorder %s132, %s133
      %p147 = scmp.eq.s32.totalorder %s36, 1
      %p148 = por %p146, %p147
      %p150 = scmp.ne.s32.totalorder %s133, %s149
      %p151 = scmp.eq.s32.totalorder %s36, 0
      %p152 = por %p150, %p151
      %s153 = ssub.s32 %s37, %s49
      %p154 = scmp.eq.s32.totalorder %s153, 0
      %s156 = sadd.s32 %s155, 1
      %s157 = scalar_select %p154, %s155, %s156
      %p160 = pneg %p154
      %p161 = scmp.eq.s32.totalorder %s30, 1
      %p162 = por %p160, %p161
      %p163 = scmp.ne.s32.totalorder %s155, %s158
      %p164 = scmp.eq.s32.totalorder %s30, 0
      %p165 = por %p163, %p164
      %p166 = scmp.ne.s32.totalorder %s155, %s158
      %p167 = scmp.eq.s32.totalorder %s35, 1
      %p168 = por %p166, %p167
      %p169 = scmp.ne.s32.totalorder %s158, %s159
      %p170 = scmp.eq.s32.totalorder %s35, 0
      %p171 = por %p169, %p170
      %p172 = scmp.ne.s32.totalorder %s158, %s159
      %p173 = scmp.eq.s32.totalorder %s36, 1
      %p174 = por %p172, %p173
      %p176 = scmp.ne.s32.totalorder %s159, %s175
      %p177 = scmp.eq.s32.totalorder %s36, 0
      %p178 = por %p176, %p177
      %p179 = scmp.le.s32.totalorder 1, %s30
      %p180 = scmp.lt.s32.totalorder %s30, 3
      %p181 = pnand %p179, %p180
      %p182 = pneg %p181
      // Predicated region
      $region9: #{tpu_custom_call.1} parent=5 // pred_check
        _
      $region10: #{tpu_custom_call.1} parent=5 // pred_check_branch
        %184 = sbr.rel (%p181) target = $region12
      $region11: #{tpu_custom_call.1} parent=5 // pred_region
        %s185 = ssub.s32 %s30, 1
        // Predicated region
        $region13: #{tpu_custom_call.1} parent=11 // pred_check
          %p186 = pneg %p63
        $region14: #{tpu_custom_call.1} parent=11 // pred_check_branch
          %188 = sbr.rel (%p186) target = $region16
        $region15: #{tpu_custom_call.1} parent=11 // pred_region
          %190 = vsyncadd [#allocation5], 0
          %s192 = sshll.u32 %s1, 4
          %s193 = int_to_ptr.hbm [resolvable:$true] %s192
          %s194 = sshll.u32 [#allocation4], 4
          %s195 = int_to_ptr.vmem [resolvable:$true] %s194
          %197 = dma.hbm_to_vmem [thread:$0]  %s193, 128, %s195, [#allocation5]
        $region16: #{tpu_custom_call.1} parent=11 // pred_fallthru
          _
      $region12: #{tpu_custom_call.1} parent=5 // pred_fallthru
        _
      %p198 = scmp.lt.s32.totalorder %s30, 2
      // Predicated region
      $region17: #{tpu_custom_call.1} parent=5 // pred_check
        %p199 = pneg %p198
      $region18: #{tpu_custom_call.1} parent=5 // pred_check_branch
        %201 = sbr.rel (%p199) target = $region20
      $region19: #{tpu_custom_call.1} parent=5 // pred_region
        // Predicated region
        $region21: #{tpu_custom_call.1} parent=19 // pred_check
          %p202 = pneg %p85
        $region22: #{tpu_custom_call.1} parent=19 // pred_check_branch
          %204 = sbr.rel (%p202) target = $region24
        $region23: #{tpu_custom_call.1} parent=19 // pred_region
          %s205 = sand.u32 %s30, 1
          %s206 = scalar_lea.sflag [#allocation8], %s205
          %s207 = sand.u32 %s75, 1
          %s208 = smul.addr %s207, 1024
          %s209 = scalar_lea.vmem [#allocation7], %s208
          %s210 = sadd.s32 %s37, %s38
          %s211 = smul.u32 32, %s210
          %213 = vsyncadd %s206, 0
          %s214 = smul.addr %s211, 8
          %s215 = smul.addr %s214, 4
          %s216 = scalar_lea.hbm %s2, %s215
          %s217 = sshll.u32 %s216, 4
          %s218 = int_to_ptr.hbm [resolvable:$true] %s217
          %s219 = sshll.u32 %s209, 4
          %s220 = int_to_ptr.vmem [resolvable:$true] %s219
          %225 = dma.hbm_to_vmem [thread:$0]  %s218, 16384, %s220, %s206, 512, 512, 32
        $region24: #{tpu_custom_call.1} parent=19 // pred_fallthru
          _
        // Predicated region
        $region25: #{tpu_custom_call.1} parent=19 // pred_check
          %p226 = pneg %p113
        $region26: #{tpu_custom_call.1} parent=19 // pred_check_branch
          %228 = sbr.rel (%p226) target = $region28
        $region27: #{tpu_custom_call.1} parent=19 // pred_region
          %s229 = sand.u32 %s30, 1
          %s230 = scalar_lea.sflag [#allocation8], %s229
          %s231 = sand.u32 %s103, 1
          %s232 = smul.addr %s231, 2
          %s233 = scalar_lea.vmem [#allocation9], %s232
          %s234 = sadd.s32 %s37, %s38
          %s235 = smul.u32 2, %s234
          %237 = vsyncadd %s230, 0
          %s238 = scalar_lea.hbm %s3, %s235
          %s240 = sshll.u32 %s238, 4
          %s241 = int_to_ptr.hbm [resolvable:$true] %s240
          %s242 = sshll.u32 %s233, 4
          %s243 = int_to_ptr.vmem [resolvable:$true] %s242
          %245 = dma.hbm_to_vmem [thread:$0]  %s241, 32, %s243, %s230
        $region28: #{tpu_custom_call.1} parent=19 // pred_fallthru
          _
      $region20: #{tpu_custom_call.1} parent=5 // pred_fallthru
        _
      %p246 = scmp.le.s32.totalorder 1, %s30
      %p247 = scmp.lt.s32.totalorder %s30, 3
      %p248 = pnand %p246, %p247
      %p249 = pneg %p248
      // Predicated region
      $region29: #{tpu_custom_call.1} parent=5 // pred_check
        _
      $region30: #{tpu_custom_call.1} parent=5 // pred_check_branch
        %251 = sbr.rel (%p248) target = $region32
      $region31: #{tpu_custom_call.1} parent=5 // pred_region
        %s252 = ssub.s32 %s30, 1
        // Predicated region
        $region33: #{tpu_custom_call.1} parent=31 // pred_check
          %p253 = pneg %p63
        $region34: #{tpu_custom_call.1} parent=31 // pred_check_branch
          %255 = sbr.rel (%p253) target = $region36
        $region35: #{tpu_custom_call.1} parent=31 // pred_region
          %257 = dma.done [#allocation5], 128
        $region36: #{tpu_custom_call.1} parent=31 // pred_fallthru
          _
        %s258 = sand.u32 %s35, 1
        %s259 = scalar_lea.sflag [#allocation8], %s258
        %s260 = sand.u32 %s78, 1
        %s261 = smul.addr %s260, 1024
        %s262 = scalar_lea.vmem [#allocation7], %s261
        // Predicated region
        $region37: #{tpu_custom_call.1} parent=31 // pred_check
          %p263 = pneg %p91
        $region38: #{tpu_custom_call.1} parent=31 // pred_check_branch
          %265 = sbr.rel (%p263) target = $region40
        $region39: #{tpu_custom_call.1} parent=31 // pred_region
          %267 = dma.done %s259, 16384
        $region40: #{tpu_custom_call.1} parent=31 // pred_fallthru
          _
        %s268 = sand.u32 %s35, 1
        %s269 = scalar_lea.sflag [#allocation8], %s268
        %s270 = sand.u32 %s106, 1
        %s271 = smul.addr %s270, 2
        %s272 = scalar_lea.vmem [#allocation9], %s271
        // Predicated region
        $region41: #{tpu_custom_call.1} parent=31 // pred_check
          %p273 = pneg %p119
        $region42: #{tpu_custom_call.1} parent=31 // pred_check_branch
          %275 = sbr.rel (%p273) target = $region44
        $region43: #{tpu_custom_call.1} parent=31 // pred_region
          %277 = dma.done %s269, 32
        $region44: #{tpu_custom_call.1} parent=31 // pred_fallthru
          _
        %p278 = pneg %p63
        %p279 = pneg %p60
        %s280 = sand.u32 %s35, 1
        %s281 = scalar_lea.sflag [#allocation8], %s280
        %s282 = sand.u32 %s78, 1
        %s283 = smul.addr %s282, 1024
        %s284 = scalar_lea.vmem [#allocation7], %s283
        %p285 = pneg %p91
        %p286 = pneg %p88
        %s287 = sand.u32 %s35, 1
        %s288 = scalar_lea.sflag [#allocation8], %s287
        %s289 = sand.u32 %s106, 1
        %s290 = smul.addr %s289, 2
        %s291 = scalar_lea.vmem [#allocation9], %s290
        %p292 = pneg %p119
        %p293 = pneg %p116
        %p294 = pneg %p145
        %p295 = pneg %p142
        %s296 = sand.u32 %s132, 1
        %s297 = scalar_lea.sflag [#allocation6], %s296
        %s298 = sand.u32 %s132, 1
        %s299 = smul.addr %s298, 8
        %s300 = scalar_lea.vmem [#allocation10], %s299
        %p301 = pneg %p171
        %p302 = pneg %p168
        %s303 = sand.u32 %s158, 1
        %s304 = scalar_lea.sflag [#allocation12], %s303
        %s305 = sand.u32 %s158, 1
        %s306 = scalar_lea.vmem [#allocation11], %s305
        %s307 = sadd.s32 %s39, %s40
        %s308 = smul.u32 32, %s307
        %s309 = sadd.s32 %s39, %s40
        %s310 = smul.u32 2, %s309
        %p311 = scmp.eq.s32.totalorder %s40, 0
        // Predicated region
        $region45: #{tpu_custom_call.1} parent=31 // pred_check
          %p312 = pneg %p311
        $region46: #{tpu_custom_call.1} parent=31 // pred_check_branch
          %314 = sbr.rel (%p312) target = $region48
        $region47: #{tpu_custom_call.1} parent=31 // pred_region
          %315 = vst [vmem:[%s300] sm:$0xff] 0.0
          %316 = vst [vmem:[%s306] sm:$0x1] 0.0
        $region48: #{tpu_custom_call.1} parent=31 // pred_fallthru
          _
        %s317 = sld [smem:[#allocation3]]
        %v318 = vld [vmem:[#allocation4] sm:$0xff]
        %v320 = vperm.slane %v318, 0
        %v321 = vperm.slane %v318, 1
        %v322 = vperm.slane %v318, 2
        %v323 = vperm.slane %v318, 3
        %v324 = vperm.slane %v318, 4
        %v325 = vperm.slane %v318, 5
        %v326 = vperm.slane %v318, 6
        %v327 = vperm.slane %v318, 7
        %v336 = vpack.c.bf16 %v320, %v320
        %v337 = vpack.c.bf16 %v321, %v321
        %v338 = vpack.c.bf16 %v322, %v322
        %v339 = vpack.c.bf16 %v323, %v323
        %v340 = vpack.c.bf16 %v324, %v324
        %v341 = vpack.c.bf16 %v325, %v325
        %v342 = vpack.c.bf16 %v326, %v326
        %v343 = vpack.c.bf16 %v327, %v327
        %v344 = vld [vmem:[%s262] sm:$0xff]
        %v345 = vld [vmem:[%s262 + $0x8] sm:$0xff]
        %v346 = vld [vmem:[%s262 + $0x10] sm:$0xff]
        %v347 = vld [vmem:[%s262 + $0x18] sm:$0xff]
        %v348 = vld [vmem:[%s262 + $0x20] sm:$0xff]
        %v349 = vld [vmem:[%s262 + $0x28] sm:$0xff]
        %v350 = vld [vmem:[%s262 + $0x30] sm:$0xff]
        %v351 = vld [vmem:[%s262 + $0x38] sm:$0xff]
        %v352 = vld [vmem:[%s262 + $0x40] sm:$0xff]
        %v353 = vld [vmem:[%s262 + $0x48] sm:$0xff]
        %v354 = vld [vmem:[%s262 + $0x50] sm:$0xff]
        %v355 = vld [vmem:[%s262 + $0x58] sm:$0xff]
        %v356 = vld [vmem:[%s262 + $0x60] sm:$0xff]
        %v357 = vld [vmem:[%s262 + $0x68] sm:$0xff]
        %v358 = vld [vmem:[%s262 + $0x70] sm:$0xff]
        %v359 = vld [vmem:[%s262 + $0x78] sm:$0xff]
        %v360 = vld [vmem:[%s262 + $0x80] sm:$0xff]
        %v361 = vld [vmem:[%s262 + $0x88] sm:$0xff]
        %v362 = vld [vmem:[%s262 + $0x90] sm:$0xff]
        %v363 = vld [vmem:[%s262 + $0x98] sm:$0xff]
        %v364 = vld [vmem:[%s262 + $0xa0] sm:$0xff]
        %v365 = vld [vmem:[%s262 + $0xa8] sm:$0xff]
        %v366 = vld [vmem:[%s262 + $0xb0] sm:$0xff]
        %v367 = vld [vmem:[%s262 + $0xb8] sm:$0xff]
        %v368 = vld [vmem:[%s262 + $0xc0] sm:$0xff]
        %v369 = vld [vmem:[%s262 + $0xc8] sm:$0xff]
        %v370 = vld [vmem:[%s262 + $0xd0] sm:$0xff]
        %v371 = vld [vmem:[%s262 + $0xd8] sm:$0xff]
        %v372 = vld [vmem:[%s262 + $0xe0] sm:$0xff]
        %v373 = vld [vmem:[%s262 + $0xe8] sm:$0xff]
        %v374 = vld [vmem:[%s262 + $0xf0] sm:$0xff]
        %v375 = vld [vmem:[%s262 + $0xf8] sm:$0xff]
        %v376 = vld [vmem:[%s262 + $0x100] sm:$0xff]
        %v377 = vld [vmem:[%s262 + $0x108] sm:$0xff]
        %v378 = vld [vmem:[%s262 + $0x110] sm:$0xff]
        %v379 = vld [vmem:[%s262 + $0x118] sm:$0xff]
        %v380 = vld [vmem:[%s262 + $0x120] sm:$0xff]
        %v381 = vld [vmem:[%s262 + $0x128] sm:$0xff]
        %v382 = vld [vmem:[%s262 + $0x130] sm:$0xff]
        %v383 = vld [vmem:[%s262 + $0x138] sm:$0xff]
        %v384 = vld [vmem:[%s262 + $0x140] sm:$0xff]
        %v385 = vld [vmem:[%s262 + $0x148] sm:$0xff]
        %v386 = vld [vmem:[%s262 + $0x150] sm:$0xff]
        %v387 = vld [vmem:[%s262 + $0x158] sm:$0xff]
        %v388 = vld [vmem:[%s262 + $0x160] sm:$0xff]
        %v389 = vld [vmem:[%s262 + $0x168] sm:$0xff]
        %v390 = vld [vmem:[%s262 + $0x170] sm:$0xff]
        %v391 = vld [vmem:[%s262 + $0x178] sm:$0xff]
        %v392 = vld [vmem:[%s262 + $0x180] sm:$0xff]
        %v393 = vld [vmem:[%s262 + $0x188] sm:$0xff]
        %v394 = vld [vmem:[%s262 + $0x190] sm:$0xff]
        %v395 = vld [vmem:[%s262 + $0x198] sm:$0xff]
        %v396 = vld [vmem:[%s262 + $0x1a0] sm:$0xff]
        %v397 = vld [vmem:[%s262 + $0x1a8] sm:$0xff]
        %v398 = vld [vmem:[%s262 + $0x1b0] sm:$0xff]
        %v399 = vld [vmem:[%s262 + $0x1b8] sm:$0xff]
        %v400 = vld [vmem:[%s262 + $0x1c0] sm:$0xff]
        %v401 = vld [vmem:[%s262 + $0x1c8] sm:$0xff]
        %v402 = vld [vmem:[%s262 + $0x1d0] sm:$0xff]
        %v403 = vld [vmem:[%s262 + $0x1d8] sm:$0xff]
        %v404 = vld [vmem:[%s262 + $0x1e0] sm:$0xff]
        %v405 = vld [vmem:[%s262 + $0x1e8] sm:$0xff]
        %v406 = vld [vmem:[%s262 + $0x1f0] sm:$0xff]
        %v407 = vld [vmem:[%s262 + $0x1f8] sm:$0xff]
        %v408 = vld [vmem:[%s262 + $0x200] sm:$0xff]
        %v409 = vld [vmem:[%s262 + $0x208] sm:$0xff]
        %v410 = vld [vmem:[%s262 + $0x210] sm:$0xff]
        %v411 = vld [vmem:[%s262 + $0x218] sm:$0xff]
        %v412 = vld [vmem:[%s262 + $0x220] sm:$0xff]
        %v413 = vld [vmem:[%s262 + $0x228] sm:$0xff]
        %v414 = vld [vmem:[%s262 + $0x230] sm:$0xff]
        %v415 = vld [vmem:[%s262 + $0x238] sm:$0xff]
        %v416 = vld [vmem:[%s262 + $0x240] sm:$0xff]
        %v417 = vld [vmem:[%s262 + $0x248] sm:$0xff]
        %v418 = vld [vmem:[%s262 + $0x250] sm:$0xff]
        %v419 = vld [vmem:[%s262 + $0x258] sm:$0xff]
        %v420 = vld [vmem:[%s262 + $0x260] sm:$0xff]
        %v421 = vld [vmem:[%s262 + $0x268] sm:$0xff]
        %v422 = vld [vmem:[%s262 + $0x270] sm:$0xff]
        %v423 = vld [vmem:[%s262 + $0x278] sm:$0xff]
        %v424 = vld [vmem:[%s262 + $0x280] sm:$0xff]
        %v425 = vld [vmem:[%s262 + $0x288] sm:$0xff]
        %v426 = vld [vmem:[%s262 + $0x290] sm:$0xff]
        %v427 = vld [vmem:[%s262 + $0x298] sm:$0xff]
        %v428 = vld [vmem:[%s262 + $0x2a0] sm:$0xff]
        %v429 = vld [vmem:[%s262 + $0x2a8] sm:$0xff]
        %v430 = vld [vmem:[%s262 + $0x2b0] sm:$0xff]
        %v431 = vld [vmem:[%s262 + $0x2b8] sm:$0xff]
        %v432 = vld [vmem:[%s262 + $0x2c0] sm:$0xff]
        %v433 = vld [vmem:[%s262 + $0x2c8] sm:$0xff]
        %v434 = vld [vmem:[%s262 + $0x2d0] sm:$0xff]
        %v435 = vld [vmem:[%s262 + $0x2d8] sm:$0xff]
        %v436 = vld [vmem:[%s262 + $0x2e0] sm:$0xff]
        %v437 = vld [vmem:[%s262 + $0x2e8] sm:$0xff]
        %v438 = vld [vmem:[%s262 + $0x2f0] sm:$0xff]
        %v439 = vld [vmem:[%s262 + $0x2f8] sm:$0xff]
        %v440 = vld [vmem:[%s262 + $0x300] sm:$0xff]
        %v441 = vld [vmem:[%s262 + $0x308] sm:$0xff]
        %v442 = vld [vmem:[%s262 + $0x310] sm:$0xff]
        %v443 = vld [vmem:[%s262 + $0x318] sm:$0xff]
        %v444 = vld [vmem:[%s262 + $0x320] sm:$0xff]
        %v445 = vld [vmem:[%s262 + $0x328] sm:$0xff]
        %v446 = vld [vmem:[%s262 + $0x330] sm:$0xff]
        %v447 = vld [vmem:[%s262 + $0x338] sm:$0xff]
        %v448 = vld [vmem:[%s262 + $0x340] sm:$0xff]
        %v449 = vld [vmem:[%s262 + $0x348] sm:$0xff]
        %v450 = vld [vmem:[%s262 + $0x350] sm:$0xff]
        %v451 = vld [vmem:[%s262 + $0x358] sm:$0xff]
        %v452 = vld [vmem:[%s262 + $0x360] sm:$0xff]
        %v453 = vld [vmem:[%s262 + $0x368] sm:$0xff]
        %v454 = vld [vmem:[%s262 + $0x370] sm:$0xff]
        %v455 = vld [vmem:[%s262 + $0x378] sm:$0xff]
        %v456 = vld [vmem:[%s262 + $0x380] sm:$0xff]
        %v457 = vld [vmem:[%s262 + $0x388] sm:$0xff]
        %v458 = vld [vmem:[%s262 + $0x390] sm:$0xff]
        %v459 = vld [vmem:[%s262 + $0x398] sm:$0xff]
        %v460 = vld [vmem:[%s262 + $0x3a0] sm:$0xff]
        %v461 = vld [vmem:[%s262 + $0x3a8] sm:$0xff]
        %v462 = vld [vmem:[%s262 + $0x3b0] sm:$0xff]
        %v463 = vld [vmem:[%s262 + $0x3b8] sm:$0xff]
        %v464 = vld [vmem:[%s262 + $0x3c0] sm:$0xff]
        %v465 = vld [vmem:[%s262 + $0x3c8] sm:$0xff]
        %v466 = vld [vmem:[%s262 + $0x3d0] sm:$0xff]
        %v467 = vld [vmem:[%s262 + $0x3d8] sm:$0xff]
        %v468 = vld [vmem:[%s262 + $0x3e0] sm:$0xff]
        %v469 = vld [vmem:[%s262 + $0x3e8] sm:$0xff]
        %v470 = vld [vmem:[%s262 + $0x3f0] sm:$0xff]
        %v471 = vld [vmem:[%s262 + $0x3f8] sm:$0xff]
        %v600 = vunpack.c.l.b16 %v344
        %v601 = vunpack.c.h.b16 %v344
        %v602 = vunpack.c.l.b16 %v345
        %v603 = vunpack.c.h.b16 %v345
        %v604 = vunpack.c.l.b16 %v346
        %v605 = vunpack.c.h.b16 %v346
        %v606 = vunpack.c.l.b16 %v347
        %v607 = vunpack.c.h.b16 %v347
        %v608 = vunpack.c.l.b16 %v348
        %v609 = vunpack.c.h.b16 %v348
        %v610 = vunpack.c.l.b16 %v349
        %v611 = vunpack.c.h.b16 %v349
        %v612 = vunpack.c.l.b16 %v350
        %v613 = vunpack.c.h.b16 %v350
        %v614 = vunpack.c.l.b16 %v351
        %v615 = vunpack.c.h.b16 %v351
        %v616 = vunpack.c.l.b16 %v352
        %v617 = vunpack.c.h.b16 %v352
        %v618 = vunpack.c.l.b16 %v353
        %v619 = vunpack.c.h.b16 %v353
        %v620 = vunpack.c.l.b16 %v354
        %v621 = vunpack.c.h.b16 %v354
        %v622 = vunpack.c.l.b16 %v355
        %v623 = vunpack.c.h.b16 %v355
        %v624 = vunpack.c.l.b16 %v356
        %v625 = vunpack.c.h.b16 %v356
        %v626 = vunpack.c.l.b16 %v357
        %v627 = vunpack.c.h.b16 %v357
        %v628 = vunpack.c.l.b16 %v358
        %v629 = vunpack.c.h.b16 %v358
        %v630 = vunpack.c.l.b16 %v359
        %v631 = vunpack.c.h.b16 %v359
        %v632 = vunpack.c.l.b16 %v360
        %v633 = vunpack.c.h.b16 %v360
        %v634 = vunpack.c.l.b16 %v361
        %v635 = vunpack.c.h.b16 %v361
        %v636 = vunpack.c.l.b16 %v362
        %v637 = vunpack.c.h.b16 %v362
        %v638 = vunpack.c.l.b16 %v363
        %v639 = vunpack.c.h.b16 %v363
        %v640 = vunpack.c.l.b16 %v364
        %v641 = vunpack.c.h.b16 %v364
        %v642 = vunpack.c.l.b16 %v365
        %v643 = vunpack.c.h.b16 %v365
        %v644 = vunpack.c.l.b16 %v366
        %v645 = vunpack.c.h.b16 %v366
        %v646 = vunpack.c.l.b16 %v367
        %v647 = vunpack.c.h.b16 %v367
        %v648 = vunpack.c.l.b16 %v368
        %v649 = vunpack.c.h.b16 %v368
        %v650 = vunpack.c.l.b16 %v369
        %v651 = vunpack.c.h.b16 %v369
        %v652 = vunpack.c.l.b16 %v370
        %v653 = vunpack.c.h.b16 %v370
        %v654 = vunpack.c.l.b16 %v371
        %v655 = vunpack.c.h.b16 %v371
        %v656 = vunpack.c.l.b16 %v372
        %v657 = vunpack.c.h.b16 %v372
        %v658 = vunpack.c.l.b16 %v373
        %v659 = vunpack.c.h.b16 %v373
        %v660 = vunpack.c.l.b16 %v374
        %v661 = vunpack.c.h.b16 %v374
        %v662 = vunpack.c.l.b16 %v375
        %v663 = vunpack.c.h.b16 %v375
        %v664 = vunpack.c.l.b16 %v376
        %v665 = vunpack.c.h.b16 %v376
        %v666 = vunpack.c.l.b16 %v377
        %v667 = vunpack.c.h.b16 %v377
        %v668 = vunpack.c.l.b16 %v378
        %v669 = vunpack.c.h.b16 %v378
        %v670 = vunpack.c.l.b16 %v379
        %v671 = vunpack.c.h.b16 %v379
        %v672 = vunpack.c.l.b16 %v380
        %v673 = vunpack.c.h.b16 %v380
        %v674 = vunpack.c.l.b16 %v381
        %v675 = vunpack.c.h.b16 %v381
        %v676 = vunpack.c.l.b16 %v382
        %v677 = vunpack.c.h.b16 %v382
        %v678 = vunpack.c.l.b16 %v383
        %v679 = vunpack.c.h.b16 %v383
        %v680 = vunpack.c.l.b16 %v384
        %v681 = vunpack.c.h.b16 %v384
        %v682 = vunpack.c.l.b16 %v385
        %v683 = vunpack.c.h.b16 %v385
        %v684 = vunpack.c.l.b16 %v386
        %v685 = vunpack.c.h.b16 %v386
        %v686 = vunpack.c.l.b16 %v387
        %v687 = vunpack.c.h.b16 %v387
        %v688 = vunpack.c.l.b16 %v388
        %v689 = vunpack.c.h.b16 %v388
        %v690 = vunpack.c.l.b16 %v389
        %v691 = vunpack.c.h.b16 %v389
        %v692 = vunpack.c.l.b16 %v390
        %v693 = vunpack.c.h.b16 %v390
        %v694 = vunpack.c.l.b16 %v391
        %v695 = vunpack.c.h.b16 %v391
        %v696 = vunpack.c.l.b16 %v392
        %v697 = vunpack.c.h.b16 %v392
        %v698 = vunpack.c.l.b16 %v393
        %v699 = vunpack.c.h.b16 %v393
        %v700 = vunpack.c.l.b16 %v394
        %v701 = vunpack.c.h.b16 %v394
        %v702 = vunpack.c.l.b16 %v395
        %v703 = vunpack.c.h.b16 %v395
        %v704 = vunpack.c.l.b16 %v396
        %v705 = vunpack.c.h.b16 %v396
        %v706 = vunpack.c.l.b16 %v397
        %v707 = vunpack.c.h.b16 %v397
        %v708 = vunpack.c.l.b16 %v398
        %v709 = vunpack.c.h.b16 %v398
        %v710 = vunpack.c.l.b16 %v399
        %v711 = vunpack.c.h.b16 %v399
        %v712 = vunpack.c.l.b16 %v400
        %v713 = vunpack.c.h.b16 %v400
        %v714 = vunpack.c.l.b16 %v401
        %v715 = vunpack.c.h.b16 %v401
        %v716 = vunpack.c.l.b16 %v402
        %v717 = vunpack.c.h.b16 %v402
        %v718 = vunpack.c.l.b16 %v403
        %v719 = vunpack.c.h.b16 %v403
        %v720 = vunpack.c.l.b16 %v404
        %v721 = vunpack.c.h.b16 %v404
        %v722 = vunpack.c.l.b16 %v405
        %v723 = vunpack.c.h.b16 %v405
        %v724 = vunpack.c.l.b16 %v406
        %v725 = vunpack.c.h.b16 %v406
        %v726 = vunpack.c.l.b16 %v407
        %v727 = vunpack.c.h.b16 %v407
        %v728 = vunpack.c.l.b16 %v408
        %v729 = vunpack.c.h.b16 %v408
        %v730 = vunpack.c.l.b16 %v409
        %v731 = vunpack.c.h.b16 %v409
        %v732 = vunpack.c.l.b16 %v410
        %v733 = vunpack.c.h.b16 %v410
        %v734 = vunpack.c.l.b16 %v411
        %v735 = vunpack.c.h.b16 %v411
        %v736 = vunpack.c.l.b16 %v412
        %v737 = vunpack.c.h.b16 %v412
        %v738 = vunpack.c.l.b16 %v413
        %v739 = vunpack.c.h.b16 %v413
        %v740 = vunpack.c.l.b16 %v414
        %v741 = vunpack.c.h.b16 %v414
        %v742 = vunpack.c.l.b16 %v415
        %v743 = vunpack.c.h.b16 %v415
        %v744 = vunpack.c.l.b16 %v416
        %v745 = vunpack.c.h.b16 %v416
        %v746 = vunpack.c.l.b16 %v417
        %v747 = vunpack.c.h.b16 %v417
        %v748 = vunpack.c.l.b16 %v418
        %v749 = vunpack.c.h.b16 %v418
        %v750 = vunpack.c.l.b16 %v419
        %v751 = vunpack.c.h.b16 %v419
        %v752 = vunpack.c.l.b16 %v420
        %v753 = vunpack.c.h.b16 %v420
        %v754 = vunpack.c.l.b16 %v421
        %v755 = vunpack.c.h.b16 %v421
        %v756 = vunpack.c.l.b16 %v422
        %v757 = vunpack.c.h.b16 %v422
        %v758 = vunpack.c.l.b16 %v423
        %v759 = vunpack.c.h.b16 %v423
        %v760 = vunpack.c.l.b16 %v424
        %v761 = vunpack.c.h.b16 %v424
        %v762 = vunpack.c.l.b16 %v425
        %v763 = vunpack.c.h.b16 %v425
        %v764 = vunpack.c.l.b16 %v426
        %v765 = vunpack.c.h.b16 %v426
        %v766 = vunpack.c.l.b16 %v427
        %v767 = vunpack.c.h.b16 %v427
        %v768 = vunpack.c.l.b16 %v428
        %v769 = vunpack.c.h.b16 %v428
        %v770 = vunpack.c.l.b16 %v429
        %v771 = vunpack.c.h.b16 %v429
        %v772 = vunpack.c.l.b16 %v430
        %v773 = vunpack.c.h.b16 %v430
        %v774 = vunpack.c.l.b16 %v431
        %v775 = vunpack.c.h.b16 %v431
        %v776 = vunpack.c.l.b16 %v432
        %v777 = vunpack.c.h.b16 %v432
        %v778 = vunpack.c.l.b16 %v433
        %v779 = vunpack.c.h.b16 %v433
        %v780 = vunpack.c.l.b16 %v434
        %v781 = vunpack.c.h.b16 %v434
        %v782 = vunpack.c.l.b16 %v435
        %v783 = vunpack.c.h.b16 %v435
        %v784 = vunpack.c.l.b16 %v436
        %v785 = vunpack.c.h.b16 %v436
        %v786 = vunpack.c.l.b16 %v437
        %v787 = vunpack.c.h.b16 %v437
        %v788 = vunpack.c.l.b16 %v438
        %v789 = vunpack.c.h.b16 %v438
        %v790 = vunpack.c.l.b16 %v439
        %v791 = vunpack.c.h.b16 %v439
        %v792 = vunpack.c.l.b16 %v440
        %v793 = vunpack.c.h.b16 %v440
        %v794 = vunpack.c.l.b16 %v441
        %v795 = vunpack.c.h.b16 %v441
        %v796 = vunpack.c.l.b16 %v442
        %v797 = vunpack.c.h.b16 %v442
        %v798 = vunpack.c.l.b16 %v443
        %v799 = vunpack.c.h.b16 %v443
        %v800 = vunpack.c.l.b16 %v444
        %v801 = vunpack.c.h.b16 %v444
        %v802 = vunpack.c.l.b16 %v445
        %v803 = vunpack.c.h.b16 %v445
        %v804 = vunpack.c.l.b16 %v446
        %v805 = vunpack.c.h.b16 %v446
        %v806 = vunpack.c.l.b16 %v447
        %v807 = vunpack.c.h.b16 %v447
        %v808 = vunpack.c.l.b16 %v448
        %v809 = vunpack.c.h.b16 %v448
        %v810 = vunpack.c.l.b16 %v449
        %v811 = vunpack.c.h.b16 %v449
        %v812 = vunpack.c.l.b16 %v450
        %v813 = vunpack.c.h.b16 %v450
        %v814 = vunpack.c.l.b16 %v451
        %v815 = vunpack.c.h.b16 %v451
        %v816 = vunpack.c.l.b16 %v452
        %v817 = vunpack.c.h.b16 %v452
        %v818 = vunpack.c.l.b16 %v453
        %v819 = vunpack.c.h.b16 %v453
        %v820 = vunpack.c.l.b16 %v454
        %v821 = vunpack.c.h.b16 %v454
        %v822 = vunpack.c.l.b16 %v455
        %v823 = vunpack.c.h.b16 %v455
        %v824 = vunpack.c.l.b16 %v456
        %v825 = vunpack.c.h.b16 %v456
        %v826 = vunpack.c.l.b16 %v457
        %v827 = vunpack.c.h.b16 %v457
        %v828 = vunpack.c.l.b16 %v458
        %v829 = vunpack.c.h.b16 %v458
        %v830 = vunpack.c.l.b16 %v459
        %v831 = vunpack.c.h.b16 %v459
        %v832 = vunpack.c.l.b16 %v460
        %v833 = vunpack.c.h.b16 %v460
        %v834 = vunpack.c.l.b16 %v461
        %v835 = vunpack.c.h.b16 %v461
        %v836 = vunpack.c.l.b16 %v462
        %v837 = vunpack.c.h.b16 %v462
        %v838 = vunpack.c.l.b16 %v463
        %v839 = vunpack.c.h.b16 %v463
        %v840 = vunpack.c.l.b16 %v464
        %v841 = vunpack.c.h.b16 %v464
        %v842 = vunpack.c.l.b16 %v465
        %v843 = vunpack.c.h.b16 %v465
        %v844 = vunpack.c.l.b16 %v466
        %v845 = vunpack.c.h.b16 %v466
        %v846 = vunpack.c.l.b16 %v467
        %v847 = vunpack.c.h.b16 %v467
        %v848 = vunpack.c.l.b16 %v468
        %v849 = vunpack.c.h.b16 %v468
        %v850 = vunpack.c.l.b16 %v469
        %v851 = vunpack.c.h.b16 %v469
        %v852 = vunpack.c.l.b16 %v470
        %v853 = vunpack.c.h.b16 %v470
        %v854 = vunpack.c.l.b16 %v471
        %v855 = vunpack.c.h.b16 %v471
        %v856 = vpack.c.b16 %v608, %v600
        %v857 = vpack.c.b16 %v609, %v601
        %v858 = vpack.c.b16 %v610, %v602
        %v859 = vpack.c.b16 %v611, %v603
        %v860 = vpack.c.b16 %v612, %v604
        %v861 = vpack.c.b16 %v613, %v605
        %v862 = vpack.c.b16 %v614, %v606
        %v863 = vpack.c.b16 %v615, %v607
        %v864 = vpack.c.b16 %v624, %v616
        %v865 = vpack.c.b16 %v625, %v617
        %v866 = vpack.c.b16 %v626, %v618
        %v867 = vpack.c.b16 %v627, %v619
        %v868 = vpack.c.b16 %v628, %v620
        %v869 = vpack.c.b16 %v629, %v621
        %v870 = vpack.c.b16 %v630, %v622
        %v871 = vpack.c.b16 %v631, %v623
        %v872 = vpack.c.b16 %v640, %v632
        %v873 = vpack.c.b16 %v641, %v633
        %v874 = vpack.c.b16 %v642, %v634
        %v875 = vpack.c.b16 %v643, %v635
        %v876 = vpack.c.b16 %v644, %v636
        %v877 = vpack.c.b16 %v645, %v637
        %v878 = vpack.c.b16 %v646, %v638
        %v879 = vpack.c.b16 %v647, %v639
        %v880 = vpack.c.b16 %v656, %v648
        %v881 = vpack.c.b16 %v657, %v649
        %v882 = vpack.c.b16 %v658, %v650
        %v883 = vpack.c.b16 %v659, %v651
        %v884 = vpack.c.b16 %v660, %v652
        %v885 = vpack.c.b16 %v661, %v653
        %v886 = vpack.c.b16 %v662, %v654
        %v887 = vpack.c.b16 %v663, %v655
        %v888 = vpack.c.b16 %v672, %v664
        %v889 = vpack.c.b16 %v673, %v665
        %v890 = vpack.c.b16 %v674, %v666
        %v891 = vpack.c.b16 %v675, %v667
        %v892 = vpack.c.b16 %v676, %v668
        %v893 = vpack.c.b16 %v677, %v669
        %v894 = vpack.c.b16 %v678, %v670
        %v895 = vpack.c.b16 %v679, %v671
        %v896 = vpack.c.b16 %v688, %v680
        %v897 = vpack.c.b16 %v689, %v681
        %v898 = vpack.c.b16 %v690, %v682
        %v899 = vpack.c.b16 %v691, %v683
        %v900 = vpack.c.b16 %v692, %v684
        %v901 = vpack.c.b16 %v693, %v685
        %v902 = vpack.c.b16 %v694, %v686
        %v903 = vpack.c.b16 %v695, %v687
        %v904 = vpack.c.b16 %v704, %v696
        %v905 = vpack.c.b16 %v705, %v697
        %v906 = vpack.c.b16 %v706, %v698
        %v907 = vpack.c.b16 %v707, %v699
        %v908 = vpack.c.b16 %v708, %v700
        %v909 = vpack.c.b16 %v709, %v701
        %v910 = vpack.c.b16 %v710, %v702
        %v911 = vpack.c.b16 %v711, %v703
        %v912 = vpack.c.b16 %v720, %v712
        %v913 = vpack.c.b16 %v721, %v713
        %v914 = vpack.c.b16 %v722, %v714
        %v915 = vpack.c.b16 %v723, %v715
        %v916 = vpack.c.b16 %v724, %v716
        %v917 = vpack.c.b16 %v725, %v717
        %v918 = vpack.c.b16 %v726, %v718
        %v919 = vpack.c.b16 %v727, %v719
        %v920 = vpack.c.b16 %v736, %v728
        %v921 = vpack.c.b16 %v737, %v729
        %v922 = vpack.c.b16 %v738, %v730
        %v923 = vpack.c.b16 %v739, %v731
        %v924 = vpack.c.b16 %v740, %v732
        %v925 = vpack.c.b16 %v741, %v733
        %v926 = vpack.c.b16 %v742, %v734
        %v927 = vpack.c.b16 %v743, %v735
        %v928 = vpack.c.b16 %v752, %v744
        %v929 = vpack.c.b16 %v753, %v745
        %v930 = vpack.c.b16 %v754, %v746
        %v931 = vpack.c.b16 %v755, %v747
        %v932 = vpack.c.b16 %v756, %v748
        %v933 = vpack.c.b16 %v757, %v749
        %v934 = vpack.c.b16 %v758, %v750
        %v935 = vpack.c.b16 %v759, %v751
        %v936 = vpack.c.b16 %v768, %v760
        %v937 = vpack.c.b16 %v769, %v761
        %v938 = vpack.c.b16 %v770, %v762
        %v939 = vpack.c.b16 %v771, %v763
        %v940 = vpack.c.b16 %v772, %v764
        %v941 = vpack.c.b16 %v773, %v765
        %v942 = vpack.c.b16 %v774, %v766
        %v943 = vpack.c.b16 %v775, %v767
        %v944 = vpack.c.b16 %v784, %v776
        %v945 = vpack.c.b16 %v785, %v777
        %v946 = vpack.c.b16 %v786, %v778
        %v947 = vpack.c.b16 %v787, %v779
        %v948 = vpack.c.b16 %v788, %v780
        %v949 = vpack.c.b16 %v789, %v781
        %v950 = vpack.c.b16 %v790, %v782
        %v951 = vpack.c.b16 %v791, %v783
        %v952 = vpack.c.b16 %v800, %v792
        %v953 = vpack.c.b16 %v801, %v793
        %v954 = vpack.c.b16 %v802, %v794
        %v955 = vpack.c.b16 %v803, %v795
        %v956 = vpack.c.b16 %v804, %v796
        %v957 = vpack.c.b16 %v805, %v797
        %v958 = vpack.c.b16 %v806, %v798
        %v959 = vpack.c.b16 %v807, %v799
        %v960 = vpack.c.b16 %v816, %v808
        %v961 = vpack.c.b16 %v817, %v809
        %v962 = vpack.c.b16 %v818, %v810
        %v963 = vpack.c.b16 %v819, %v811
        %v964 = vpack.c.b16 %v820, %v812
        %v965 = vpack.c.b16 %v821, %v813
        %v966 = vpack.c.b16 %v822, %v814
        %v967 = vpack.c.b16 %v823, %v815
        %v968 = vpack.c.b16 %v832, %v824
        %v969 = vpack.c.b16 %v833, %v825
        %v970 = vpack.c.b16 %v834, %v826
        %v971 = vpack.c.b16 %v835, %v827
        %v972 = vpack.c.b16 %v836, %v828
        %v973 = vpack.c.b16 %v837, %v829
        %v974 = vpack.c.b16 %v838, %v830
        %v975 = vpack.c.b16 %v839, %v831
        %v976 = vpack.c.b16 %v848, %v840
        %v977 = vpack.c.b16 %v849, %v841
        %v978 = vpack.c.b16 %v850, %v842
        %v979 = vpack.c.b16 %v851, %v843
        %v980 = vpack.c.b16 %v852, %v844
        %v981 = vpack.c.b16 %v853, %v845
        %v982 = vpack.c.b16 %v854, %v846
        %v983 = vpack.c.b16 %v855, %v847
        %1112 = vmatpush.bf16.xpose.msra.mxu0 %v912
        %1113 = vmatpush.bf16.xpose.msra.mxu0 %v904
        %1114 = vmatpush.bf16.xpose.msra.mxu0 %v896
        %1115 = vmatpush.bf16.xpose.msra.mxu0 %v888
        %1116 = vmatpush.bf16.xpose.msra.mxu0 %v880
        %1117 = vmatpush.bf16.xpose.msra.mxu0 %v872
        %1118 = vmatpush.bf16.xpose.msra.mxu0 %v864
        %1119 = vmatpush.bf16.xpose.msra.mxu0 %v856
        %1120 = vmatmul.bf16.gmra.mxu0 %v336
        %v1121 = vpop.f32.mrf.mxu0
        %v1122 = vadd.f32 0.0, %v1121
        %v1123 = vpop.f32.mrf.mxu0
        %1124 = vdwg.mxu0
        %1125 = vmatpush.bf16.xpose.msra.mxu0 %v913
        %1126 = vmatpush.bf16.xpose.msra.mxu0 %v905
        %1127 = vmatpush.bf16.xpose.msra.mxu0 %v897
        %1128 = vmatpush.bf16.xpose.msra.mxu0 %v889
        %1129 = vmatpush.bf16.xpose.msra.mxu0 %v881
        %1130 = vmatpush.bf16.xpose.msra.mxu0 %v873
        %1131 = vmatpush.bf16.xpose.msra.mxu0 %v865
        %1132 = vmatpush.bf16.xpose.msra.mxu0 %v857
        %1133 = vmatmul.bf16.gmra.mxu0 %v337
        %v1134 = vpop.f32.mrf.mxu0
        %v1135 = vadd.f32 %v1122, %v1134
        %v1136 = vpop.f32.mrf.mxu0
        %1137 = vdwg.mxu0
        %1138 = vmatpush.bf16.xpose.msra.mxu0 %v914
        %1139 = vmatpush.bf16.xpose.msra.mxu0 %v906
        %1140 = vmatpush.bf16.xpose.msra.mxu0 %v898
        %1141 = vmatpush.bf16.xpose.msra.mxu0 %v890
        %1142 = vmatpush.bf16.xpose.msra.mxu0 %v882
        %1143 = vmatpush.bf16.xpose.msra.mxu0 %v874
        %1144 = vmatpush.bf16.xpose.msra.mxu0 %v866
        %1145 = vmatpush.bf16.xpose.msra.mxu0 %v858
        %1146 = vmatmul.bf16.gmra.mxu0 %v338
        %v1147 = vpop.f32.mrf.mxu0
        %v1148 = vadd.f32 %v1135, %v1147
        %v1149 = vpop.f32.mrf.mxu0
        %1150 = vdwg.mxu0
        %1151 = vmatpush.bf16.xpose.msra.mxu0 %v915
        %1152 = vmatpush.bf16.xpose.msra.mxu0 %v907
        %1153 = vmatpush.bf16.xpose.msra.mxu0 %v899
        %1154 = vmatpush.bf16.xpose.msra.mxu0 %v891
        %1155 = vmatpush.bf16.xpose.msra.mxu0 %v883
        %1156 = vmatpush.bf16.xpose.msra.mxu0 %v875
        %1157 = vmatpush.bf16.xpose.msra.mxu0 %v867
        %1158 = vmatpush.bf16.xpose.msra.mxu0 %v859
        %1159 = vmatmul.bf16.gmra.mxu0 %v339
        %v1160 = vpop.f32.mrf.mxu0
        %v1161 = vadd.f32 %v1148, %v1160
        %v1162 = vpop.f32.mrf.mxu0
        %1163 = vdwg.mxu0
        %1164 = vmatpush.bf16.xpose.msra.mxu0 %v916
        %1165 = vmatpush.bf16.xpose.msra.mxu0 %v908
        %1166 = vmatpush.bf16.xpose.msra.mxu0 %v900
        %1167 = vmatpush.bf16.xpose.msra.mxu0 %v892
        %1168 = vmatpush.bf16.xpose.msra.mxu0 %v884
        %1169 = vmatpush.bf16.xpose.msra.mxu0 %v876
        %1170 = vmatpush.bf16.xpose.msra.mxu0 %v868
        %1171 = vmatpush.bf16.xpose.msra.mxu0 %v860
        %1172 = vmatmul.bf16.gmra.mxu0 %v340
        %v1173 = vpop.f32.mrf.mxu0
        %v1174 = vadd.f32 %v1161, %v1173
        %v1175 = vpop.f32.mrf.mxu0
        %1176 = vdwg.mxu0
        %1177 = vmatpush.bf16.xpose.msra.mxu0 %v917
        %1178 = vmatpush.bf16.xpose.msra.mxu0 %v909
        %1179 = vmatpush.bf16.xpose.msra.mxu0 %v901
        %1180 = vmatpush.bf16.xpose.msra.mxu0 %v893
        %1181 = vmatpush.bf16.xpose.msra.mxu0 %v885
        %1182 = vmatpush.bf16.xpose.msra.mxu0 %v877
        %1183 = vmatpush.bf16.xpose.msra.mxu0 %v869
        %1184 = vmatpush.bf16.xpose.msra.mxu0 %v861
        %1185 = vmatmul.bf16.gmra.mxu0 %v341
        %v1186 = vpop.f32.mrf.mxu0
        %v1187 = vadd.f32 %v1174, %v1186
        %v1188 = vpop.f32.mrf.mxu0
        %1189 = vdwg.mxu0
        %1190 = vmatpush.bf16.xpose.msra.mxu0 %v918
        %1191 = vmatpush.bf16.xpose.msra.mxu0 %v910
        %1192 = vmatpush.bf16.xpose.msra.mxu0 %v902
        %1193 = vmatpush.bf16.xpose.msra.mxu0 %v894
        %1194 = vmatpush.bf16.xpose.msra.mxu0 %v886
        %1195 = vmatpush.bf16.xpose.msra.mxu0 %v878
        %1196 = vmatpush.bf16.xpose.msra.mxu0 %v870
        %1197 = vmatpush.bf16.xpose.msra.mxu0 %v862
        %1198 = vmatmul.bf16.gmra.mxu0 %v342
        %v1199 = vpop.f32.mrf.mxu0
        %v1200 = vadd.f32 %v1187, %v1199
        %v1201 = vpop.f32.mrf.mxu0
        %1202 = vdwg.mxu0
        %1203 = vmatpush.bf16.xpose.msra.mxu0 %v919
        %1204 = vmatpush.bf16.xpose.msra.mxu0 %v911
        %1205 = vmatpush.bf16.xpose.msra.mxu0 %v903
        %1206 = vmatpush.bf16.xpose.msra.mxu0 %v895
        %1207 = vmatpush.bf16.xpose.msra.mxu0 %v887
        %1208 = vmatpush.bf16.xpose.msra.mxu0 %v879
        %1209 = vmatpush.bf16.xpose.msra.mxu0 %v871
        %1210 = vmatpush.bf16.xpose.msra.mxu0 %v863
        %1211 = vmatmul.bf16.gmra.mxu0 %v343
        %v1212 = vpop.f32.mrf.mxu0
        %v1213 = vadd.f32 %v1200, %v1212
        %v1214 = vpop.f32.mrf.mxu0
        %1215 = vdwg.mxu0
        %1216 = vmatpush.bf16.xpose.msra.mxu0 %v976
        %1217 = vmatpush.bf16.xpose.msra.mxu0 %v968
        %1218 = vmatpush.bf16.xpose.msra.mxu0 %v960
        %1219 = vmatpush.bf16.xpose.msra.mxu0 %v952
        %1220 = vmatpush.bf16.xpose.msra.mxu0 %v944
        %1221 = vmatpush.bf16.xpose.msra.mxu0 %v936
        %1222 = vmatpush.bf16.xpose.msra.mxu0 %v928
        %1223 = vmatpush.bf16.xpose.msra.mxu0 %v920
        %1224 = vmatmul.bf16.gmra.mxu0 %v336
        %v1225 = vpop.f32.mrf.mxu0
        %v1226 = vadd.f32 0.0, %v1225
        %v1227 = vpop.f32.mrf.mxu0
        %1228 = vdwg.mxu0
        %1229 = vmatpush.bf16.xpose.msra.mxu0 %v977
        %1230 = vmatpush.bf16.xpose.msra.mxu0 %v969
        %1231 = vmatpush.bf16.xpose.msra.mxu0 %v961
        %1232 = vmatpush.bf16.xpose.msra.mxu0 %v953
        %1233 = vmatpush.bf16.xpose.msra.mxu0 %v945
        %1234 = vmatpush.bf16.xpose.msra.mxu0 %v937
        %1235 = vmatpush.bf16.xpose.msra.mxu0 %v929
        %1236 = vmatpush.bf16.xpose.msra.mxu0 %v921
        %1237 = vmatmul.bf16.gmra.mxu0 %v337
        %v1238 = vpop.f32.mrf.mxu0
        %v1239 = vadd.f32 %v1226, %v1238
        %v1240 = vpop.f32.mrf.mxu0
        %1241 = vdwg.mxu0
        %1242 = vmatpush.bf16.xpose.msra.mxu0 %v978
        %1243 = vmatpush.bf16.xpose.msra.mxu0 %v970
        %1244 = vmatpush.bf16.xpose.msra.mxu0 %v962
        %1245 = vmatpush.bf16.xpose.msra.mxu0 %v954
        %1246 = vmatpush.bf16.xpose.msra.mxu0 %v946
        %1247 = vmatpush.bf16.xpose.msra.mxu0 %v938
        %1248 = vmatpush.bf16.xpose.msra.mxu0 %v930
        %1249 = vmatpush.bf16.xpose.msra.mxu0 %v922
        %1250 = vmatmul.bf16.gmra.mxu0 %v338
        %v1251 = vpop.f32.mrf.mxu0
        %v1252 = vadd.f32 %v1239, %v1251
        %v1253 = vpop.f32.mrf.mxu0
        %1254 = vdwg.mxu0
        %1255 = vmatpush.bf16.xpose.msra.mxu0 %v979
        %1256 = vmatpush.bf16.xpose.msra.mxu0 %v971
        %1257 = vmatpush.bf16.xpose.msra.mxu0 %v963
        %1258 = vmatpush.bf16.xpose.msra.mxu0 %v955
        %1259 = vmatpush.bf16.xpose.msra.mxu0 %v947
        %1260 = vmatpush.bf16.xpose.msra.mxu0 %v939
        %1261 = vmatpush.bf16.xpose.msra.mxu0 %v931
        %1262 = vmatpush.bf16.xpose.msra.mxu0 %v923
        %1263 = vmatmul.bf16.gmra.mxu0 %v339
        %v1264 = vpop.f32.mrf.mxu0
        %v1265 = vadd.f32 %v1252, %v1264
        %v1266 = vpop.f32.mrf.mxu0
        %1267 = vdwg.mxu0
        %1268 = vmatpush.bf16.xpose.msra.mxu0 %v980
        %1269 = vmatpush.bf16.xpose.msra.mxu0 %v972
        %1270 = vmatpush.bf16.xpose.msra.mxu0 %v964
        %1271 = vmatpush.bf16.xpose.msra.mxu0 %v956
        %1272 = vmatpush.bf16.xpose.msra.mxu0 %v948
        %1273 = vmatpush.bf16.xpose.msra.mxu0 %v940
        %1274 = vmatpush.bf16.xpose.msra.mxu0 %v932
        %1275 = vmatpush.bf16.xpose.msra.mxu0 %v924
        %1276 = vmatmul.bf16.gmra.mxu0 %v340
        %v1277 = vpop.f32.mrf.mxu0
        %v1278 = vadd.f32 %v1265, %v1277
        %v1279 = vpop.f32.mrf.mxu0
        %1280 = vdwg.mxu0
        %1281 = vmatpush.bf16.xpose.msra.mxu0 %v981
        %1282 = vmatpush.bf16.xpose.msra.mxu0 %v973
        %1283 = vmatpush.bf16.xpose.msra.mxu0 %v965
        %1284 = vmatpush.bf16.xpose.msra.mxu0 %v957
        %1285 = vmatpush.bf16.xpose.msra.mxu0 %v949
        %1286 = vmatpush.bf16.xpose.msra.mxu0 %v941
        %1287 = vmatpush.bf16.xpose.msra.mxu0 %v933
        %1288 = vmatpush.bf16.xpose.msra.mxu0 %v925
        %1289 = vmatmul.bf16.gmra.mxu0 %v341
        %v1290 = vpop.f32.mrf.mxu0
        %v1291 = vadd.f32 %v1278, %v1290
        %v1292 = vpop.f32.mrf.mxu0
        %1293 = vdwg.mxu0
        %1294 = vmatpush.bf16.xpose.msra.mxu0 %v982
        %1295 = vmatpush.bf16.xpose.msra.mxu0 %v974
        %1296 = vmatpush.bf16.xpose.msra.mxu0 %v966
        %1297 = vmatpush.bf16.xpose.msra.mxu0 %v958
        %1298 = vmatpush.bf16.xpose.msra.mxu0 %v950
        %1299 = vmatpush.bf16.xpose.msra.mxu0 %v942
        %1300 = vmatpush.bf16.xpose.msra.mxu0 %v934
        %1301 = vmatpush.bf16.xpose.msra.mxu0 %v926
        %1302 = vmatmul.bf16.gmra.mxu0 %v342
        %v1303 = vpop.f32.mrf.mxu0
        %v1304 = vadd.f32 %v1291, %v1303
        %v1305 = vpop.f32.mrf.mxu0
        %1306 = vdwg.mxu0
        %1307 = vmatpush.bf16.xpose.msra.mxu0 %v983
        %1308 = vmatpush.bf16.xpose.msra.mxu0 %v975
        %1309 = vmatpush.bf16.xpose.msra.mxu0 %v967
        %1310 = vmatpush.bf16.xpose.msra.mxu0 %v959
        %1311 = vmatpush.bf16.xpose.msra.mxu0 %v951
        %1312 = vmatpush.bf16.xpose.msra.mxu0 %v943
        %1313 = vmatpush.bf16.xpose.msra.mxu0 %v935
        %1314 = vmatpush.bf16.xpose.msra.mxu0 %v927
        %1315 = vmatmul.bf16.gmra.mxu0 %v343
        %v1316 = vpop.f32.mrf.mxu0
        %v1317 = vadd.f32 %v1304, %v1316
        %v1318 = vpop.f32.mrf.mxu0
        %1319 = vdwg.mxu0
        %v1320 = vld [vmem:[%s272] sm:$0x3]
        %v1321 = vstv %s317
        %v1322 = vmul.f32 %v1321, %v1213
        %v1323 = vmul.f32 %v1321, %v1317
        %v1326 = vrot.slane %v1323, 7
        %vm1327 = vcmask 1040384
        %v1328 = vsel %vm1327, %v1322, %v1326
        %v1330 = vsub.f32 %v1320, %v1328
        %v1331 = vld [vmem:[%s306] sm:$0x1]
        %v1332 = vmul.f32 %v1330, %v1330
        %v1334 = vperm.slane %v1332, 0
        %v1335 = vperm.slane %v1332, 1
        %v1338 = vsel %vm1327, %v1334, 0.0
        %v1339 = vsel %vm1327, %v1335, 0.0
        %v1340 = vadd.f32 %v1338, %v1339
        %1341 = vadd.xlane.f32.xlu0 %v1340
        %v1342 = vpop.xlane.xlu0 %1341
        %v1343 = vrot.slane %v1342, 4
        %v1344 = vadd.f32 %v1342, %v1343
        %v1345 = vrot.slane %v1344, 2
        %v1346 = vadd.f32 %v1344, %v1345
        %v1347 = vrot.slane %v1346, 1
        %v1348 = vadd.f32 %v1346, %v1347
        %s1349 = vtos %v1348
        %v1350 = vstv %s1349
        %v1351 = vadd.f32 %v1331, %v1350
        %1352 = vst [vmem:[%s306] sm:$0x1] %v1351
        %v1354 = vperm.slane %v1330, 0
        %v1355 = vperm.slane %v1330, 1
        %v1358 = vpack.c.bf16 %v1354, %v1354
        %v1359 = vpack.c.bf16 %v1355, %v1355
        %1360 = vmatpush.bf16.msra.mxu0 %v912
        %1361 = vmatpush.bf16.msra.mxu0 %v904
        %1362 = vmatpush.bf16.msra.mxu0 %v896
        %1363 = vmatpush.bf16.msra.mxu0 %v888
        %1364 = vmatpush.bf16.msra.mxu0 %v880
        %1365 = vmatpush.bf16.msra.mxu0 %v872
        %1366 = vmatpush.bf16.msra.mxu0 %v864
        %1367 = vmatpush.bf16.msra.mxu0 %v856
        %1368 = vmatmul.bf16.gmra.mxu0 %v1358
        %v1369 = vpop.f32.mrf.mxu0
        %v1370 = vadd.f32 0.0, %v1369
        %v1371 = vpop.f32.mrf.mxu0
        %1372 = vdwg.mxu0
        %1373 = vmatpush.bf16.msra.mxu0 %v976
        %1374 = vmatpush.bf16.msra.mxu0 %v968
        %1375 = vmatpush.bf16.msra.mxu0 %v960
        %1376 = vmatpush.bf16.msra.mxu0 %v952
        %1377 = vmatpush.bf16.msra.mxu0 %v944
        %1378 = vmatpush.bf16.msra.mxu0 %v936
        %1379 = vmatpush.bf16.msra.mxu0 %v928
        %1380 = vmatpush.bf16.msra.mxu0 %v920
        %1381 = vmatmul.bf16.gmra.mxu0 %v1359
        %v1382 = vpop.f32.mrf.mxu0
        %v1383 = vadd.f32 %v1370, %v1382
        %v1384 = vpop.f32.mrf.mxu0
        %1385 = vdwg.mxu0
        %1386 = vmatpush.bf16.msra.mxu0 %v913
        %1387 = vmatpush.bf16.msra.mxu0 %v905
        %1388 = vmatpush.bf16.msra.mxu0 %v897
        %1389 = vmatpush.bf16.msra.mxu0 %v889
        %1390 = vmatpush.bf16.msra.mxu0 %v881
        %1391 = vmatpush.bf16.msra.mxu0 %v873
        %1392 = vmatpush.bf16.msra.mxu0 %v865
        %1393 = vmatpush.bf16.msra.mxu0 %v857
        %1394 = vmatmul.bf16.gmra.mxu0 %v1358
        %v1395 = vpop.f32.mrf.mxu0
        %v1396 = vadd.f32 0.0, %v1395
        %v1397 = vpop.f32.mrf.mxu0
        %1398 = vdwg.mxu0
        %1399 = vmatpush.bf16.msra.mxu0 %v977
        %1400 = vmatpush.bf16.msra.mxu0 %v969
        %1401 = vmatpush.bf16.msra.mxu0 %v961
        %1402 = vmatpush.bf16.msra.mxu0 %v953
        %1403 = vmatpush.bf16.msra.mxu0 %v945
        %1404 = vmatpush.bf16.msra.mxu0 %v937
        %1405 = vmatpush.bf16.msra.mxu0 %v929
        %1406 = vmatpush.bf16.msra.mxu0 %v921
        %1407 = vmatmul.bf16.gmra.mxu0 %v1359
        %v1408 = vpop.f32.mrf.mxu0
        %v1409 = vadd.f32 %v1396, %v1408
        %v1410 = vpop.f32.mrf.mxu0
        %1411 = vdwg.mxu0
        %1412 = vmatpush.bf16.msra.mxu0 %v914
        %1413 = vmatpush.bf16.msra.mxu0 %v906
        %1414 = vmatpush.bf16.msra.mxu0 %v898
        %1415 = vmatpush.bf16.msra.mxu0 %v890
        %1416 = vmatpush.bf16.msra.mxu0 %v882
        %1417 = vmatpush.bf16.msra.mxu0 %v874
        %1418 = vmatpush.bf16.msra.mxu0 %v866
        %1419 = vmatpush.bf16.msra.mxu0 %v858
        %1420 = vmatmul.bf16.gmra.mxu0 %v1358
        %v1421 = vpop.f32.mrf.mxu0
        %v1422 = vadd.f32 0.0, %v1421
        %v1423 = vpop.f32.mrf.mxu0
        %1424 = vdwg.mxu0
        %1425 = vmatpush.bf16.msra.mxu0 %v978
        %1426 = vmatpush.bf16.msra.mxu0 %v970
        %1427 = vmatpush.bf16.msra.mxu0 %v962
        %1428 = vmatpush.bf16.msra.mxu0 %v954
        %1429 = vmatpush.bf16.msra.mxu0 %v946
        %1430 = vmatpush.bf16.msra.mxu0 %v938
        %1431 = vmatpush.bf16.msra.mxu0 %v930
        %1432 = vmatpush.bf16.msra.mxu0 %v922
        %1433 = vmatmul.bf16.gmra.mxu0 %v1359
        %v1434 = vpop.f32.mrf.mxu0
        %v1435 = vadd.f32 %v1422, %v1434
        %v1436 = vpop.f32.mrf.mxu0
        %1437 = vdwg.mxu0
        %1438 = vmatpush.bf16.msra.mxu0 %v915
        %1439 = vmatpush.bf16.msra.mxu0 %v907
        %1440 = vmatpush.bf16.msra.mxu0 %v899
        %1441 = vmatpush.bf16.msra.mxu0 %v891
        %1442 = vmatpush.bf16.msra.mxu0 %v883
        %1443 = vmatpush.bf16.msra.mxu0 %v875
        %1444 = vmatpush.bf16.msra.mxu0 %v867
        %1445 = vmatpush.bf16.msra.mxu0 %v859
        %1446 = vmatmul.bf16.gmra.mxu0 %v1358
        %v1447 = vpop.f32.mrf.mxu0
        %v1448 = vadd.f32 0.0, %v1447
        %v1449 = vpop.f32.mrf.mxu0
        %1450 = vdwg.mxu0
        %1451 = vmatpush.bf16.msra.mxu0 %v979
        %1452 = vmatpush.bf16.msra.mxu0 %v971
        %1453 = vmatpush.bf16.msra.mxu0 %v963
        %1454 = vmatpush.bf16.msra.mxu0 %v955
        %1455 = vmatpush.bf16.msra.mxu0 %v947
        %1456 = vmatpush.bf16.msra.mxu0 %v939
        %1457 = vmatpush.bf16.msra.mxu0 %v931
        %1458 = vmatpush.bf16.msra.mxu0 %v923
        %1459 = vmatmul.bf16.gmra.mxu0 %v1359
        %v1460 = vpop.f32.mrf.mxu0
        %v1461 = vadd.f32 %v1448, %v1460
        %v1462 = vpop.f32.mrf.mxu0
        %1463 = vdwg.mxu0
        %1464 = vmatpush.bf16.msra.mxu0 %v916
        %1465 = vmatpush.bf16.msra.mxu0 %v908
        %1466 = vmatpush.bf16.msra.mxu0 %v900
        %1467 = vmatpush.bf16.msra.mxu0 %v892
        %1468 = vmatpush.bf16.msra.mxu0 %v884
        %1469 = vmatpush.bf16.msra.mxu0 %v876
        %1470 = vmatpush.bf16.msra.mxu0 %v868
        %1471 = vmatpush.bf16.msra.mxu0 %v860
        %1472 = vmatmul.bf16.gmra.mxu0 %v1358
        %v1473 = vpop.f32.mrf.mxu0
        %v1474 = vadd.f32 0.0, %v1473
        %v1475 = vpop.f32.mrf.mxu0
        %1476 = vdwg.mxu0
        %1477 = vmatpush.bf16.msra.mxu0 %v980
        %1478 = vmatpush.bf16.msra.mxu0 %v972
        %1479 = vmatpush.bf16.msra.mxu0 %v964
        %1480 = vmatpush.bf16.msra.mxu0 %v956
        %1481 = vmatpush.bf16.msra.mxu0 %v948
        %1482 = vmatpush.bf16.msra.mxu0 %v940
        %1483 = vmatpush.bf16.msra.mxu0 %v932
        %1484 = vmatpush.bf16.msra.mxu0 %v924
        %1485 = vmatmul.bf16.gmra.mxu0 %v1359
        %v1486 = vpop.f32.mrf.mxu0
        %v1487 = vadd.f32 %v1474, %v1486
        %v1488 = vpop.f32.mrf.mxu0
        %1489 = vdwg.mxu0
        %1490 = vmatpush.bf16.msra.mxu0 %v917
        %1491 = vmatpush.bf16.msra.mxu0 %v909
        %1492 = vmatpush.bf16.msra.mxu0 %v901
        %1493 = vmatpush.bf16.msra.mxu0 %v893
        %1494 = vmatpush.bf16.msra.mxu0 %v885
        %1495 = vmatpush.bf16.msra.mxu0 %v877
        %1496 = vmatpush.bf16.msra.mxu0 %v869
        %1497 = vmatpush.bf16.msra.mxu0 %v861
        %1498 = vmatmul.bf16.gmra.mxu0 %v1358
        %v1499 = vpop.f32.mrf.mxu0
        %v1500 = vadd.f32 0.0, %v1499
        %v1501 = vpop.f32.mrf.mxu0
        %1502 = vdwg.mxu0
        %1503 = vmatpush.bf16.msra.mxu0 %v981
        %1504 = vmatpush.bf16.msra.mxu0 %v973
        %1505 = vmatpush.bf16.msra.mxu0 %v965
        %1506 = vmatpush.bf16.msra.mxu0 %v957
        %1507 = vmatpush.bf16.msra.mxu0 %v949
        %1508 = vmatpush.bf16.msra.mxu0 %v941
        %1509 = vmatpush.bf16.msra.mxu0 %v933
        %1510 = vmatpush.bf16.msra.mxu0 %v925
        %1511 = vmatmul.bf16.gmra.mxu0 %v1359
        %v1512 = vpop.f32.mrf.mxu0
        %v1513 = vadd.f32 %v1500, %v1512
        %v1514 = vpop.f32.mrf.mxu0
        %1515 = vdwg.mxu0
        %1516 = vmatpush.bf16.msra.mxu0 %v918
        %1517 = vmatpush.bf16.msra.mxu0 %v910
        %1518 = vmatpush.bf16.msra.mxu0 %v902
        %1519 = vmatpush.bf16.msra.mxu0 %v894
        %1520 = vmatpush.bf16.msra.mxu0 %v886
        %1521 = vmatpush.bf16.msra.mxu0 %v878
        %1522 = vmatpush.bf16.msra.mxu0 %v870
        %1523 = vmatpush.bf16.msra.mxu0 %v862
        %1524 = vmatmul.bf16.gmra.mxu0 %v1358
        %v1525 = vpop.f32.mrf.mxu0
        %v1526 = vadd.f32 0.0, %v1525
        %v1527 = vpop.f32.mrf.mxu0
        %1528 = vdwg.mxu0
        %1529 = vmatpush.bf16.msra.mxu0 %v982
        %1530 = vmatpush.bf16.msra.mxu0 %v974
        %1531 = vmatpush.bf16.msra.mxu0 %v966
        %1532 = vmatpush.bf16.msra.mxu0 %v958
        %1533 = vmatpush.bf16.msra.mxu0 %v950
        %1534 = vmatpush.bf16.msra.mxu0 %v942
        %1535 = vmatpush.bf16.msra.mxu0 %v934
        %1536 = vmatpush.bf16.msra.mxu0 %v926
        %1537 = vmatmul.bf16.gmra.mxu0 %v1359
        %v1538 = vpop.f32.mrf.mxu0
        %v1539 = vadd.f32 %v1526, %v1538
        %v1540 = vpop.f32.mrf.mxu0
        %1541 = vdwg.mxu0
        %1542 = vmatpush.bf16.msra.mxu0 %v919
        %1543 = vmatpush.bf16.msra.mxu0 %v911
        %1544 = vmatpush.bf16.msra.mxu0 %v903
        %1545 = vmatpush.bf16.msra.mxu0 %v895
        %1546 = vmatpush.bf16.msra.mxu0 %v887
        %1547 = vmatpush.bf16.msra.mxu0 %v879
        %1548 = vmatpush.bf16.msra.mxu0 %v871
        %1549 = vmatpush.bf16.msra.mxu0 %v863
        %1550 = vmatmul.bf16.gmra.mxu0 %v1358
        %v1551 = vpop.f32.mrf.mxu0
        %v1552 = vadd.f32 0.0, %v1551
        %v1553 = vpop.f32.mrf.mxu0
        %1554 = vdwg.mxu0
        %1555 = vmatpush.bf16.msra.mxu0 %v983
        %1556 = vmatpush.bf16.msra.mxu0 %v975
        %1557 = vmatpush.bf16.msra.mxu0 %v967
        %1558 = vmatpush.bf16.msra.mxu0 %v959
        %1559 = vmatpush.bf16.msra.mxu0 %v951
        %1560 = vmatpush.bf16.msra.mxu0 %v943
        %1561 = vmatpush.bf16.msra.mxu0 %v935
        %1562 = vmatpush.bf16.msra.mxu0 %v927
        %1563 = vmatmul.bf16.gmra.mxu0 %v1359
        %v1564 = vpop.f32.mrf.mxu0
        %v1565 = vadd.f32 %v1552, %v1564
        %v1566 = vpop.f32.mrf.mxu0
        %1567 = vdwg.mxu0
        %v1568 = vld [vmem:[%s300] sm:$0xff]
        %v1577 = vrot.slane %v1409, 7
        %v1578 = vrot.slane %v1435, 6
        %v1579 = vrot.slane %v1461, 5
        %v1580 = vrot.slane %v1487, 4
        %v1581 = vrot.slane %v1513, 3
        %v1582 = vrot.slane %v1539, 2
        %v1583 = vrot.slane %v1565, 1
        %v1584 = vsel %vm1327, %v1383, %v1577
        %vm1585 = vcmask 1042434
        %v1586 = vsel %vm1585, %v1578, %v1579
        %vm1587 = vcmask 1041408
        %v1588 = vsel %vm1587, %v1584, %v1586
        %vm1589 = vcmask 1044484
        %v1590 = vsel %vm1589, %v1580, %v1581
        %vm1591 = vcmask 1046534
        %v1592 = vsel %vm1591, %v1582, %v1583
        %vm1593 = vcmask 1045508
        %v1594 = vsel %vm1593, %v1590, %v1592
        %vm1595 = vcmask 1043456
        %v1596 = vsel %vm1595, %v1588, %v1594
        %v1598 = vadd.f32 %v1568, %v1596
        %1599 = vst [vmem:[%s300] sm:$0xff] %v1598
        %s1600 = sand.u32 %s132, 1
        %s1601 = scalar_lea.sflag [#allocation6], %s1600
        %s1602 = sand.u32 %s132, 1
        %s1603 = smul.addr %s1602, 8
        %s1604 = scalar_lea.vmem [#allocation10], %s1603
        %s1605 = sand.u32 %s158, 1
        %s1606 = scalar_lea.sflag [#allocation12], %s1605
        %s1607 = sand.u32 %s158, 1
        %s1608 = scalar_lea.vmem [#allocation11], %s1607
        // Predicated region
        $region49: #{tpu_custom_call.1} parent=31 // pred_check
          %p1609 = pneg %p142
        $region50: #{tpu_custom_call.1} parent=31 // pred_check_branch
          %1611 = sbr.rel (%p1609) target = $region52
        $region51: #{tpu_custom_call.1} parent=31 // pred_region
          %1613 = vsyncadd %s1601, 0
          %s1614 = smul.addr %s39, 8
          %s1615 = scalar_lea.hbm %s4, %s1614
          %s1617 = sshll.u32 %s1604, 4
          %s1618 = int_to_ptr.vmem [resolvable:$true] %s1617
          %s1619 = sshll.u32 %s1615, 4
          %s1620 = int_to_ptr.hbm [resolvable:$true] %s1619
          %1622 = dma.vmem_to_hbm [thread:$0]  %s1618, 128, %s1620, %s1601
        $region52: #{tpu_custom_call.1} parent=31 // pred_fallthru
          _
        // Predicated region
        $region53: #{tpu_custom_call.1} parent=31 // pred_check
          %p1623 = pneg %p168
        $region54: #{tpu_custom_call.1} parent=31 // pred_check_branch
          %1625 = sbr.rel (%p1623) target = $region56
        $region55: #{tpu_custom_call.1} parent=31 // pred_region
          %1627 = vsyncadd %s1606, 0
          %s1628 = scalar_lea.hbm %s5, %s39
          %s1630 = sshll.u32 %s1608, 4
          %s1631 = int_to_ptr.vmem [resolvable:$true] %s1630
          %s1632 = sshll.u32 %s1628, 4
          %s1633 = int_to_ptr.hbm [resolvable:$true] %s1632
          %1635 = dma.vmem_to_hbm [thread:$0]  %s1631, 16, %s1633, %s1606
        $region56: #{tpu_custom_call.1} parent=31 // pred_fallthru
          _
      $region32: #{tpu_custom_call.1} parent=5 // pred_fallthru
        _
      %p1636 = scmp.le.s32.totalorder 2, %s30
      // Predicated region
      $region57: #{tpu_custom_call.1} parent=5 // pred_check
        %p1637 = pneg %p1636
      $region58: #{tpu_custom_call.1} parent=5 // pred_check_branch
        %1639 = sbr.rel (%p1637) target = $region60
      $region59: #{tpu_custom_call.1} parent=5 // pred_region
        %s1640 = ssub.s32 %s30, 2
        // Predicated region
        $region61: #{tpu_custom_call.1} parent=59 // pred_check
          %p1641 = pneg %p148
        $region62: #{tpu_custom_call.1} parent=59 // pred_check_branch
          %1643 = sbr.rel (%p1641) target = $region64
        $region63: #{tpu_custom_call.1} parent=59 // pred_region
          %s1644 = sand.u32 %s133, 1
          %s1645 = scalar_lea.sflag [#allocation6], %s1644
          %s1646 = sand.u32 %s133, 1
          %s1647 = smul.addr %s1646, 8
          %s1648 = scalar_lea.vmem [#allocation10], %s1647
          %1650 = dma.done %s1645, 128
        $region64: #{tpu_custom_call.1} parent=59 // pred_fallthru
          _
        // Predicated region
        $region65: #{tpu_custom_call.1} parent=59 // pred_check
          %p1651 = pneg %p174
        $region66: #{tpu_custom_call.1} parent=59 // pred_check_branch
          %1653 = sbr.rel (%p1651) target = $region68
        $region67: #{tpu_custom_call.1} parent=59 // pred_region
          %s1654 = sand.u32 %s159, 1
          %s1655 = scalar_lea.sflag [#allocation12], %s1654
          %s1656 = sand.u32 %s159, 1
          %s1657 = scalar_lea.vmem [#allocation11], %s1656
          %1659 = dma.done %s1655, 16
        $region68: #{tpu_custom_call.1} parent=59 // pred_fallthru
          _
      $region60: #{tpu_custom_call.1} parent=5 // pred_fallthru
        _
    $region6: #{tpu_custom_call.1} parent=1 // loop_footer
      %s34 = sadd.s32 1, %s30
    $region7: #{tpu_custom_call.1} parent=1 // loop_footer_branch
      %29 = sbr.rel target = $region3
    $region8: #{tpu_custom_call.1} parent=1 // loop_exit
      _
    %1660 = vsyncpa [#allocation5], 1
    %s1661 = scalar_lea.sflag [#allocation5], 1
    %1662 = vsyncpa %s1661, 1
    %1663 = vsyncpa [#allocation8], 1
    %s1664 = scalar_lea.sflag [#allocation8], 1
    %1665 = vsyncpa %s1664, 1
    %1666 = vsyncpa [#allocation6], 1
    %s1667 = scalar_lea.sflag [#allocation6], 1
    %1668 = vsyncpa %s1667, 1
    %1669 = vsyncpa [#allocation12], 1
    %s1670 = scalar_lea.sflag [#allocation12], 1
    %1671 = vsyncpa %s1670, 1

</llo_original>
